<compile_context>
chip_gen: v7x
topology: tpu7x:2x2x1
jax: 0.10.0
libtpu: 0.0.40
codegen_flags: <defaults>
</compile_context>

<pallas_src>
import numpy as np
import jax
import jax.numpy as jnp
from jax.experimental import pallas as pl
from jax.experimental.pallas import tpu as pltpu

LANE = 128


def _round_up(x, m):
    return (x + m - 1) // m * m


def _cdiv(a, b):
    return -(-a // b)


def actor_kernel(x_ref, w1_ref, w2_ref, w3_ref, w4_ref, b_hid_ref, b_out_ref,
                 out_ref):
    x = x_ref[...]                  # (TB, S)
    bh = b_hid_ref[...]             # (8, W): rows 0..2 = hidden-layer biases
    bo = b_out_ref[...]             # (8, OUT_W): row0=b4, row1=scale, row2=scale-1

    def dot(a, b):
        return jnp.dot(a, b, preferred_element_type=jnp.float32,
                       precision=jax.lax.Precision.HIGHEST)

    h = jnp.maximum(dot(x, w1_ref[...]) + bh[0:1, :], 0.0)
    h = jnp.maximum(dot(h, w2_ref[...]) + bh[1:2, :], 0.0)
    h = jnp.maximum(dot(h, w3_ref[...]) + bh[2:3, :], 0.0)
    raw = dot(h, w4_ref[...]) + bo[0:1, :]

    # Column 0 -> tanh, other real columns -> sigmoid, one EUP pass:
    #   tanh(x) = 2*sigmoid(2x) - 1  (scale row is 2.0 on col 0, 1.0 elsewhere)
    scale = bo[1:2, :]
    offset = bo[2:3, :]             # == scale - 1, precomputed on host
    out_ref[...] = (scale * jax.nn.sigmoid(scale * raw) - offset).astype(out_ref.dtype)


def actor_forward(state, packed_params, *, block_b=1024):
    """state: [B, environment_states] f32.
    Returns bounded outputs for the full batch, shape [B, action_dim].
    (PyTorch module semantics == actor_forward(state, params)[0].)"""
    w1p, w2p, w3p, w4p, b_hid, b_out, action_dim = packed_params
    B, S = state.shape
    W = w1p.shape[1]
    OUT_W = w4p.shape[1]

    # Batch tile: multiple of 8 sublanes, large enough to amortize the ~0.35 us
    # per-grid-step overhead, but capped at ceil(B/2) so a big block_b never
    # collapses the grid to a single step (v7x dual-TensorCore sharding).
    tb = min(block_b, _round_up(_cdiv(B, 2), 8))
    tb = max(tb, 8)
    B_pad = _round_up(B, tb)
    if B_pad != B:
        state = jnp.pad(state, ((0, B_pad - B), (0, 0)))

    out = pl.pallas_call(
        actor_kernel,
        out_shape=jax.ShapeDtypeStruct((B_pad, OUT_W), jnp.float32),
        grid=(B_pad // tb,),
        in_specs=[
            pl.BlockSpec((tb, S), lambda i: (i, 0)),     # state: blocked over batch
            pl.BlockSpec((S, W), lambda i: (0, 0)),      # weights/biases: resident
            pl.BlockSpec((W, W), lambda i: (0, 0)),
            pl.BlockSpec((W, W), lambda i: (0, 0)),
            pl.BlockSpec((W, OUT_W), lambda i: (0, 0)),  # narrow final layer
            pl.BlockSpec((8, W), lambda i: (0, 0)),      # hidden biases (packed)
            pl.BlockSpec((8, OUT_W), lambda i: (0, 0)),  # b4 / scale / scale-1
        ],
        out_specs=pl.BlockSpec((tb, OUT_W), lambda i: (i, 0)),
        compiler_params=pltpu.CompilerParams(
            dimension_semantics=("parallel",)),
    )(state, w1p, w2p, w3p, w4p, b_hid, b_out)

    # Output is only OUT_W (=8) lanes wide, so this slice re-reads a tiny buffer.
    return out[:B, :action_dim]


def init_linear(key, fan_in, fan_out):
    """Deterministic init matching nn.Linear's default U(-1/sqrt(in), 1/sqrt(in)).
    Weight is stored as [in, out] (transposed vs. PyTorch)."""
    kw, kb = jax.random.split(key)
    bound = 1.0 / np.sqrt(fan_in)
    w = jax.random.uniform(kw, (fan_in, fan_out), jnp.float32, -bound, bound)
    b = jax.random.uniform(kb, (fan_out,), jnp.float32, -bound, bound)
    return w, b


def make_actor_params(key, environment_states, action_dim, hidden):
    k1, k2, k3, k4 = jax.random.split(key, 4)
    w1, b1 = init_linear(k1, environment_states, hidden)
    w2, b2 = init_linear(k2, hidden, hidden)
    w3, b3 = init_linear(k3, hidden, hidden)
    w4, b4 = init_linear(k4, hidden, action_dim)
    return (w1, b1, w2, b2, w3, b3, w4, b4)


def pack_actor_params(raw_params, environment_states, hidden, action_dim):
    """Zero-pad hidden widths to a lane-dense W (multiple of 128), keep the
    final layer narrow (OUT_W=8 lanes), pack hidden biases into one (8, W)
    tile and the final bias + bounding constants into one (8, OUT_W) tile."""
    w1, b1, w2, b2, w3, b3, w4, b4 = raw_params
    W = _round_up(hidden, LANE)
    OUT_W = max(_round_up(action_dim, 8), 8)

    def pad_w(w, rows, cols):
        out = jnp.zeros((rows, cols), jnp.float32)
        return out.at[: w.shape[0], : w.shape[1]].set(w)

    w1p = pad_w(w1, environment_states, W)
    w2p = pad_w(w2, W, W)
    w3p = pad_w(w3, W, W)
    w4p = pad_w(w4, W, OUT_W)

    b_hid = jnp.zeros((8, W), jnp.float32)
    b_hid = b_hid.at[0, :hidden].set(b1)
    b_hid = b_hid.at[1, :hidden].set(b2)
    b_hid = b_hid.at[2, :hidden].set(b3)

    scale = np.ones((OUT_W,), np.float32)
    scale[0] = 2.0                                   # col 0 -> tanh via sigmoid
    b_out = jnp.zeros((8, OUT_W), jnp.float32)
    b_out = b_out.at[0, :action_dim].set(b4)
    b_out = b_out.at[1, :].set(jnp.asarray(scale))
    b_out = b_out.at[2, :].set(jnp.asarray(scale - 1.0))

    return (w1p, w2p, w3p, w4p, b_hid, b_out, action_dim)


def actor_reference(state, raw_params):
    """Pure-JAX reference (mirrors the PyTorch forward), full batch.
    Matmul precision pinned to HIGHEST to match the kernel exactly."""
    w1, b1, w2, b2, w3, b3, w4, b4 = raw_params
    hi = jax.lax.Precision.HIGHEST
    mm = lambda a, b: jnp.dot(a, b, precision=hi)
    h = jnp.maximum(mm(state, w1) + b1, 0.0)
    h = jnp.maximum(mm(h, w2) + b2, 0.0)
    h = jnp.maximum(mm(h, w3) + b3, 0.0)
    raw = mm(h, w4) + b4
    o1 = jnp.tanh(raw[:, 0])
    o2 = jax.nn.sigmoid(raw[:, 1])
    o3 = jax.nn.sigmoid(raw[:, 2])
    return jnp.stack([o1, o2, o3], axis=1)


if __name__ == "__main__":
    environment_states = 8
    action_dim = 3          # forward() indexes columns 0,1,2
    hidden = 32
    batch = 2

    key = jax.random.PRNGKey(0)
    k_params, k_state, k_big, k_odd = jax.random.split(key, 4)
    raw_params = make_actor_params(k_params, environment_states, action_dim, hidden)
    packed = pack_actor_params(raw_params, environment_states, hidden, action_dim)

    # Small, module-shaped input (PyTorch module returns row 0 of the batch).
    state = jax.random.normal(k_state, (batch, environment_states), jnp.float32)
    out = jax.block_until_ready(actor_forward(state, packed))
    ref = actor_reference(state, raw_params)
    np.testing.assert_allclose(np.asarray(out), np.asarray(ref), rtol=1e-5, atol=1e-5)
    module_output = np.asarray(out)[0]   # == numpy_outputs[0] in the PyTorch module
    assert module_output.shape == (action_dim,)

    # Larger batch: exercises the 2-step parallel grid (v7x dual-TC path) and
    # the resident-weight pipeline.
    big_state = jax.random.normal(k_big, (512, environment_states), jnp.float32)
    big_out = jax.block_until_ready(actor_forward(big_state, packed))
    big_ref = actor_reference(big_state, raw_params)
    np.testing.assert_allclose(np.asarray(big_out), np.asarray(big_ref),
                               rtol=1e-5, atol=1e-5)

    # Non-multiple batch: exercises the padded-row path.
    odd_state = jax.random.normal(k_odd, (1000, environment_states), jnp.float32)
    odd_out = jax.block_until_ready(actor_forward(odd_state, packed))
    odd_ref = actor_reference(odd_state, raw_params)
    np.testing.assert_allclose(np.asarray(odd_out), np.asarray(odd_ref),
                               rtol=1e-5, atol=1e-5)

    print("KERNEL_OK")
</pallas_src>

<mosaic_0001>
module attributes {stable_mosaic.version = 11 : i64} {
  func.func @actor_kernel(%arg0: i32, %arg1: memref<8x8xf32, #tpu.memory_space<vmem>>, %arg2: memref<8x128xf32, #tpu.memory_space<vmem>>, %arg3: memref<128x128xf32, #tpu.memory_space<vmem>>, %arg4: memref<128x128xf32, #tpu.memory_space<vmem>>, %arg5: memref<128x8xf32, #tpu.memory_space<vmem>>, %arg6: memref<8x128xf32, #tpu.memory_space<vmem>>, %arg7: memref<8x8xf32, #tpu.memory_space<vmem>>, %arg8: memref<8x8xf32, #tpu.memory_space<vmem>>) attributes {dimension_semantics = [#tpu.dimension_semantics<parallel>], iteration_bounds = array<i64: 1>, scalar_prefetch = 0 : i64, scratch_operands = 0 : i64, tpu.core_type = #tpu.core_type<tc>, window_params = [{transform_indices = @transform_0, window_bounds = array<i64: 8, 8>}, {pipeline_mode = #tpu.pipeline_mode<synchronous>, transform_indices = @transform_1, window_bounds = array<i64: 8, 128>}, {pipeline_mode = #tpu.pipeline_mode<synchronous>, transform_indices = @transform_2, window_bounds = array<i64: 128, 128>}, {pipeline_mode = #tpu.pipeline_mode<synchronous>, transform_indices = @transform_3, window_bounds = array<i64: 128, 128>}, {pipeline_mode = #tpu.pipeline_mode<synchronous>, transform_indices = @transform_4, window_bounds = array<i64: 128, 8>}, {pipeline_mode = #tpu.pipeline_mode<synchronous>, transform_indices = @transform_5, window_bounds = array<i64: 8, 128>}, {pipeline_mode = #tpu.pipeline_mode<synchronous>, transform_indices = @transform_6, window_bounds = array<i64: 8, 8>}, {transform_indices = @transform_7, window_bounds = array<i64: 8, 8>}]} {
    %c0 = arith.constant 0 : index
    %c0_0 = arith.constant 0 : index
    %0 = vector.load %arg1[%c0, %c0_0] : memref<8x8xf32, #tpu.memory_space<vmem>>, vector<8x8xf32>
    %c0_1 = arith.constant 0 : index
    %c0_2 = arith.constant 0 : index
    %1 = vector.load %arg6[%c0_1, %c0_2] : memref<8x128xf32, #tpu.memory_space<vmem>>, vector<8x128xf32>
    %c0_3 = arith.constant 0 : index
    %c0_4 = arith.constant 0 : index
    %2 = vector.load %arg7[%c0_3, %c0_4] : memref<8x8xf32, #tpu.memory_space<vmem>>, vector<8x8xf32>
    %c0_5 = arith.constant 0 : index
    %c0_6 = arith.constant 0 : index
    %3 = vector.load %arg2[%c0_5, %c0_6] : memref<8x128xf32, #tpu.memory_space<vmem>>, vector<8x128xf32>
    %cst = arith.constant dense<0.000000e+00> : vector<8x128xf32>
    %4 = tpu.matmul %0, %3, %cst {dimension_numbers = #tpu.dot_dimension_numbers<[1], [0], [0], [1], [0, 0, 1, 1], [], []>, precision = #tpu.contract_precision<fp32>} : vector<8x8xf32>, vector<8x128xf32>, vector<8x128xf32> -> vector<8x128xf32>
    %5 = vector.extract_strided_slice %1 {offsets = [0, 0], sizes = [1, 128], strides = [1, 1]} : vector<8x128xf32> to vector<1x128xf32>
    %6 = vector.broadcast %5 : vector<1x128xf32> to vector<8x128xf32>
    %7 = arith.addf %4, %6 : vector<8x128xf32>
    %cst_7 = arith.constant 0.000000e+00 : f32
    %8 = vector.broadcast %cst_7 : f32 to vector<8x128xf32>
    %9 = arith.maximumf %7, %8 : vector<8x128xf32>
    %c0_8 = arith.constant 0 : index
    %c0_9 = arith.constant 0 : index
    %10 = vector.load %arg3[%c0_8, %c0_9] : memref<128x128xf32, #tpu.memory_space<vmem>>, vector<128x128xf32>
    %cst_10 = arith.constant dense<0.000000e+00> : vector<8x128xf32>
    %11 = tpu.matmul %9, %10, %cst_10 {dimension_numbers = #tpu.dot_dimension_numbers<[1], [0], [0], [1], [0, 0, 1, 1], [], []>, precision = #tpu.contract_precision<fp32>} : vector<8x128xf32>, vector<128x128xf32>, vector<8x128xf32> -> vector<8x128xf32>
    %12 = vector.extract_strided_slice %1 {offsets = [1, 0], sizes = [1, 128], strides = [1, 1]} : vector<8x128xf32> to vector<1x128xf32>
    %13 = vector.broadcast %12 : vector<1x128xf32> to vector<8x128xf32>
    %14 = arith.addf %11, %13 : vector<8x128xf32>
    %cst_11 = arith.constant 0.000000e+00 : f32
    %15 = vector.broadcast %cst_11 : f32 to vector<8x128xf32>
    %16 = arith.maximumf %14, %15 : vector<8x128xf32>
    %c0_12 = arith.constant 0 : index
    %c0_13 = arith.constant 0 : index
    %17 = vector.load %arg4[%c0_12, %c0_13] : memref<128x128xf32, #tpu.memory_space<vmem>>, vector<128x128xf32>
    %cst_14 = arith.constant dense<0.000000e+00> : vector<8x128xf32>
    %18 = tpu.matmul %16, %17, %cst_14 {dimension_numbers = #tpu.dot_dimension_numbers<[1], [0], [0], [1], [0, 0, 1, 1], [], []>, precision = #tpu.contract_precision<fp32>} : vector<8x128xf32>, vector<128x128xf32>, vector<8x128xf32> -> vector<8x128xf32>
    %19 = vector.extract_strided_slice %1 {offsets = [2, 0], sizes = [1, 128], strides = [1, 1]} : vector<8x128xf32> to vector<1x128xf32>
    %20 = vector.broadcast %19 : vector<1x128xf32> to vector<8x128xf32>
    %21 = arith.addf %18, %20 : vector<8x128xf32>
    %cst_15 = arith.constant 0.000000e+00 : f32
    %22 = vector.broadcast %cst_15 : f32 to vector<8x128xf32>
    %23 = arith.maximumf %21, %22 : vector<8x128xf32>
    %c0_16 = arith.constant 0 : index
    %c0_17 = arith.constant 0 : index
    %24 = vector.load %arg5[%c0_16, %c0_17] : memref<128x8xf32, #tpu.memory_space<vmem>>, vector<128x8xf32>
    %cst_18 = arith.constant dense<0.000000e+00> : vector<8x8xf32>
    %25 = tpu.matmul %23, %24, %cst_18 {dimension_numbers = #tpu.dot_dimension_numbers<[1], [0], [0], [1], [0, 0, 1, 1], [], []>, precision = #tpu.contract_precision<fp32>} : vector<8x128xf32>, vector<128x8xf32>, vector<8x8xf32> -> vector<8x8xf32>
    %26 = vector.extract_strided_slice %2 {offsets = [0, 0], sizes = [1, 8], strides = [1, 1]} : vector<8x8xf32> to vector<1x8xf32>
    %27 = vector.broadcast %26 : vector<1x8xf32> to vector<8x8xf32>
    %28 = arith.addf %25, %27 : vector<8x8xf32>
    %29 = vector.extract_strided_slice %2 {offsets = [1, 0], sizes = [1, 8], strides = [1, 1]} : vector<8x8xf32> to vector<1x8xf32>
    %30 = vector.extract_strided_slice %2 {offsets = [2, 0], sizes = [1, 8], strides = [1, 1]} : vector<8x8xf32> to vector<1x8xf32>
    %31 = vector.broadcast %29 : vector<1x8xf32> to vector<8x8xf32>
    %32 = arith.mulf %31, %28 : vector<8x8xf32>
    %33 = arith.negf %32 : vector<8x8xf32>
    %34 = math.exp %33 : vector<8x8xf32>
    %cst_19 = arith.constant 1.000000e+00 : f32
    %35 = vector.broadcast %cst_19 : f32 to vector<8x8xf32>
    %36 = arith.addf %35, %34 : vector<8x8xf32>
    %37 = arith.divf %35, %36 : vector<8x8xf32>
    %38 = vector.broadcast %29 : vector<1x8xf32> to vector<8x8xf32>
    %39 = arith.mulf %38, %37 : vector<8x8xf32>
    %40 = vector.broadcast %30 : vector<1x8xf32> to vector<8x8xf32>
    %41 = arith.subf %39, %40 : vector<8x8xf32>
    %c0_20 = arith.constant 0 : index
    %c0_21 = arith.constant 0 : index
    %42 = vector.load %arg8[%c0_20, %c0_21] : memref<8x8xf32, #tpu.memory_space<vmem>>, vector<8x8xf32>
    tpu.vector_store %arg8[%c0_20, %c0_21], %41 {strides = array<i32>} : memref<8x8xf32, #tpu.memory_space<vmem>>, vector<8x8xf32>,
    return
  }
  func.func @transform_0(%arg0: i32) -> (i32, i32) {
    %c0_i32 = arith.constant 0 : i32
    %c0_i32_0 = arith.constant 0 : i32
    return %arg0, %c0_i32 : i32, i32
  }
  func.func @transform_1(%arg0: i32) -> (i32, i32) {
    %c0_i32 = arith.constant 0 : i32
    %c0_i32_0 = arith.constant 0 : i32
    %c0_i32_1 = arith.constant 0 : i32
    return %c0_i32, %c0_i32_0 : i32, i32
  }
  func.func @transform_2(%arg0: i32) -> (i32, i32) {
    %c0_i32 = arith.constant 0 : i32
    %c0_i32_0 = arith.constant 0 : i32
    %c0_i32_1 = arith.constant 0 : i32
    return %c0_i32, %c0_i32_0 : i32, i32
  }
  func.func @transform_3(%arg0: i32) -> (i32, i32) {
    %c0_i32 = arith.constant 0 : i32
    %c0_i32_0 = arith.constant 0 : i32
    %c0_i32_1 = arith.constant 0 : i32
    return %c0_i32, %c0_i32_0 : i32, i32
  }
  func.func @transform_4(%arg0: i32) -> (i32, i32) {
    %c0_i32 = arith.constant 0 : i32
    %c0_i32_0 = arith.constant 0 : i32
    %c0_i32_1 = arith.constant 0 : i32
    return %c0_i32, %c0_i32_0 : i32, i32
  }
  func.func @transform_5(%arg0: i32) -> (i32, i32) {
    %c0_i32 = arith.constant 0 : i32
    %c0_i32_0 = arith.constant 0 : i32
    %c0_i32_1 = arith.constant 0 : i32
    return %c0_i32, %c0_i32_0 : i32, i32
  }
  func.func @transform_6(%arg0: i32) -> (i32, i32) {
    %c0_i32 = arith.constant 0 : i32
    %c0_i32_0 = arith.constant 0 : i32
    %c0_i32_1 = arith.constant 0 : i32
    return %c0_i32, %c0_i32_0 : i32, i32
  }
  func.func @transform_7(%arg0: i32) -> (i32, i32) {
    %c0_i32 = arith.constant 0 : i32
    %c0_i32_0 = arith.constant 0 : i32
    return %arg0, %c0_i32 : i32, i32
  }
}

</mosaic_0001>

<llo_original>
// kernel: tpu_custom_call.1
$region0: #{tpu_custom_call.1}
  #allocation0 [shape = 'u32[]', space=smem, size = 0x4, offset = 0x4, fixed_abs, tag = 'smem constant byte address 0x4 - core index']
  #allocation1 [shape = 'u32[144,128]{1,0:T(1,128)}', space=vmem, size = 0x12000, scoped, tag = 'internal scratch']
  %s0 = inlined_call_operand.vmem [shape: f32[8,8], index: 0, kind: input, shape index: {}]
  %s1 = inlined_call_operand.hbm [shape: f32[8,128], index: 1, kind: input, shape index: {}]
  %s2 = inlined_call_operand.vmem [shape: f32[128,128], index: 2, kind: input, shape index: {}]
  %s3 = inlined_call_operand.hbm [shape: f32[128,128], index: 3, kind: input, shape index: {}]
  %s4 = inlined_call_operand.vmem [shape: f32[128,8], index: 4, kind: input, shape index: {}]
  %s5 = inlined_call_operand.vmem [shape: f32[8,128], index: 5, kind: input, shape index: {}]
  %s6 = inlined_call_operand.hbm [shape: f32[8,8], index: 6, kind: input, shape index: {}]
  %s7 = inlined_call_operand.hbm [shape: f32[8,8], index: 7, kind: output, shape index: {}]
  %s8 = sld [smem:[#allocation0]]
  $region50: #{tpu_custom_call.1} parent=0
    _
  %s10 = ssub.s32 1, %s8
  %s11 = scalar_select 0, %s10, %s8
  $region1: #{tpu_custom_call.1} parent=0
    #allocation2 [shape = 'u8[4096]{0}', space=vmem, size = 0x1000, scoped, tag = 'input window, operand 1, single buffered']
    #allocation3 [shape = 's32[1]{0}', space=sflag, size = 0x4, scoped, tag = 'scoped memory for tpu_custom_call.1']
    #allocation4 [shape = 's32[1]{0}', space=sflag, size = 0x4, scoped, tag = 'scoped memory for tpu_custom_call.1']
    #allocation5 [shape = 'u8[65536]{0}', space=vmem, size = 0x10000, scoped, tag = 'input window, operand 3, single buffered']
    #allocation6 [shape = 's32[1]{0}', space=sflag, size = 0x4, scoped, tag = 'scoped memory for tpu_custom_call.1']
    #allocation7 [shape = 'u8[4096]{0}', space=vmem, size = 0x1000, scoped, tag = 'input window, operand 6, single buffered']
    #allocation8 [shape = 'u8[4096]{0}', space=vmem, size = 0x1000, scoped, tag = 'output window, operand 0, single buffered']
    %12 = vsyncpa [#allocation3], 0
    %13 = vsyncpa [#allocation6], 0
    %14 = vsyncpa [#allocation4], 0
    // Predicated region
    $region2: #{tpu_custom_call.1} parent=1 // pred_check
      _
    $region3: #{tpu_custom_call.1} parent=1 // pred_check_branch
      %16 = sbr.rel (0) target = $region5
    $region4: #{tpu_custom_call.1} parent=1 // pred_region
      _
    $region5: #{tpu_custom_call.1} parent=1 // pred_fallthru
      _
    // Predicated region
    $region6: #{tpu_custom_call.1} parent=1 // pred_check
      _
    $region7: #{tpu_custom_call.1} parent=1 // pred_check_branch
      %18 = sbr.rel (0) target = $region9
    $region8: #{tpu_custom_call.1} parent=1 // pred_region
      %s20 = ssub.s32 128, 128
      %21 = vsyncadd [#allocation3], %s20
      %s23 = sshll.u32 [#allocation2], 4
      %s24 = int_to_ptr.vmem [resolvable:$true] %s23
      %26 = dma.hbm_to_vmem [thread:$0]  %s1, 128, %s24, [#allocation3]
    $region9: #{tpu_custom_call.1} parent=1 // pred_fallthru
      _
    // Predicated region
    $region10: #{tpu_custom_call.1} parent=1 // pred_check
      _
    $region11: #{tpu_custom_call.1} parent=1 // pred_check_branch
      %28 = sbr.rel (0) target = $region13
    $region12: #{tpu_custom_call.1} parent=1 // pred_region
      _
    $region13: #{tpu_custom_call.1} parent=1 // pred_fallthru
      _
    // Predicated region
    $region14: #{tpu_custom_call.1} parent=1 // pred_check
      _
    $region15: #{tpu_custom_call.1} parent=1 // pred_check_branch
      %30 = sbr.rel (0) target = $region17
    $region16: #{tpu_custom_call.1} parent=1 // pred_region
      %s32 = ssub.s32 2048, 2048
      %33 = vsyncadd [#allocation6], %s32
      %s34 = sshll.u32 [#allocation5], 4
      %s35 = int_to_ptr.vmem [resolvable:$true] %s34
      %40 = dma.hbm_to_vmem [thread:$0]  %s3, 2048, %s35, [#allocation6], 128, 128, 8
    $region17: #{tpu_custom_call.1} parent=1 // pred_fallthru
      _
    // Predicated region
    $region18: #{tpu_custom_call.1} parent=1 // pred_check
      _
    $region19: #{tpu_custom_call.1} parent=1 // pred_check_branch
      %42 = sbr.rel (0) target = $region21
    $region20: #{tpu_custom_call.1} parent=1 // pred_region
      _
    $region21: #{tpu_custom_call.1} parent=1 // pred_fallthru
      _
    // Predicated region
    $region22: #{tpu_custom_call.1} parent=1 // pred_check
      _
    $region23: #{tpu_custom_call.1} parent=1 // pred_check_branch
      %44 = sbr.rel (0) target = $region25
    $region24: #{tpu_custom_call.1} parent=1 // pred_region
      _
    $region25: #{tpu_custom_call.1} parent=1 // pred_fallthru
      _
    // Predicated region
    $region26: #{tpu_custom_call.1} parent=1 // pred_check
      _
    $region27: #{tpu_custom_call.1} parent=1 // pred_check_branch
      %46 = sbr.rel (0) target = $region29
    $region28: #{tpu_custom_call.1} parent=1 // pred_region
      %s48 = ssub.s32 128, 128
      %49 = vsyncadd [#allocation6], %s48
      %s51 = sshll.u32 [#allocation7], 4
      %s52 = int_to_ptr.vmem [resolvable:$true] %s51
      %54 = dma.hbm_to_vmem [thread:$0]  %s6, 128, %s52, [#allocation6]
    $region29: #{tpu_custom_call.1} parent=1 // pred_fallthru
      _
    // Predicated region
    $region30: #{tpu_custom_call.1} parent=1 // pred_check
      _
    $region31: #{tpu_custom_call.1} parent=1 // pred_check_branch
      %56 = sbr.rel (0) target = $region33
    $region32: #{tpu_custom_call.1} parent=1 // pred_region
      %57 = dma.done [#allocation3], 128
    $region33: #{tpu_custom_call.1} parent=1 // pred_fallthru
      _
    // Predicated region
    $region34: #{tpu_custom_call.1} parent=1 // pred_check
      _
    $region35: #{tpu_custom_call.1} parent=1 // pred_check_branch
      %59 = sbr.rel (0) target = $region37
    $region36: #{tpu_custom_call.1} parent=1 // pred_region
      %60 = dma.done [#allocation6], 2048
    $region37: #{tpu_custom_call.1} parent=1 // pred_fallthru
      _
    // Predicated region
    $region38: #{tpu_custom_call.1} parent=1 // pred_check
      _
    $region39: #{tpu_custom_call.1} parent=1 // pred_check_branch
      %62 = sbr.rel (0) target = $region41
    $region40: #{tpu_custom_call.1} parent=1 // pred_region
      %63 = dma.done [#allocation6], 128
    $region41: #{tpu_custom_call.1} parent=1 // pred_fallthru
      _
    %v64 = vld [vmem:[%s0] sm:$0xff]
    %v65 = vld [vmem:[%s5] sm:$0xff]
    %v66 = vld [vmem:[#allocation7] sm:$0xff]
    %v67 = vld [vmem:[#allocation2] sm:$0xff]
    %v68 = vlaneseq
    %v69 = vshrl.u32 %v68, 7
    %v70 = vsub.s32 0, %v69
    %v71 = vrot.slane %v65, %v70
    %vm72 = vcmask 64512
    %v74 = vsel %vm72, %v64, 0
    %76 = vmatprep.subr.mxu0 0.0
    %v77 = vand.u32 %v67, 4294901760
    %78 = vmatpush1.msra.mxu0 %v77
    %79 = vmatprep.subr.mxu0 0.0
    %80 = vmatpush1.msra.mxu0 0.0
    %81 = vmatprep.subr.mxu0 0.0
    %82 = vmatpush1.msra.mxu0 0.0
    %83 = vmatprep.subr.mxu0 0.0
    %84 = vmatpush1.msra.mxu0 0.0
    %85 = vmatprep.subr.mxu0 0.0
    %86 = vmatpush1.msra.mxu0 0.0
    %87 = vmatprep.subr.mxu0 0.0
    %88 = vmatpush1.msra.mxu0 0.0
    %89 = vmatprep.subr.mxu0 0.0
    %90 = vmatpush1.msra.mxu0 0.0
    %91 = vmatprep.subr.mxu0 0.0
    %92 = vmatpush1.msra.mxu0 0.0
    %93 = vmatprep.subr.mxu0 0.0
    %94 = vmatpush1.msra.mxu0 0.0
    %95 = vmatprep.subr.mxu0 0.0
    %96 = vmatpush1.msra.mxu0 0.0
    %97 = vmatprep.subr.mxu0 0.0
    %98 = vmatpush1.msra.mxu0 0.0
    %99 = vmatprep.subr.mxu0 0.0
    %100 = vmatpush1.msra.mxu0 0.0
    %101 = vmatprep.subr.mxu0 0.0
    %102 = vmatpush1.msra.mxu0 0.0
    %103 = vmatprep.subr.mxu0 0.0
    %104 = vmatpush1.msra.mxu0 0.0
    %105 = vmatprep.subr.mxu0 0.0
    %106 = vmatpush1.msra.mxu0 0.0
    %107 = vmatprep.subr.mxu0 0.0
    %108 = vmatpush1.msra.mxu0 0.0
    %109 = vmatprep.subr.mxu0 0.0
    %110 = vmatpush1.msra.mxu0 0.0
    %111 = vmatprep.subr.mxu0 0.0
    %112 = vmatpush1.msra.mxu0 0.0
    %113 = vmatprep.subr.mxu0 0.0
    %114 = vmatpush1.msra.mxu0 0.0
    %115 = vmatprep.subr.mxu0 0.0
    %116 = vmatpush1.msra.mxu0 0.0
    %117 = vmatprep.subr.mxu0 0.0
    %118 = vmatpush1.msra.mxu0 0.0
    %119 = vmatprep.subr.mxu0 0.0
    %120 = vmatpush1.msra.mxu0 0.0
    %121 = vmatprep.subr.mxu0 0.0
    %122 = vmatpush1.msra.mxu0 0.0
    %123 = vmatprep.subr.mxu0 0.0
    %124 = vmatpush1.msra.mxu0 0.0
    %125 = vmatprep.subr.mxu0 0.0
    %126 = vmatpush1.msra.mxu0 0.0
    %127 = vmatprep.subr.mxu0 0.0
    %128 = vmatpush1.msra.mxu0 0.0
    %129 = vmatprep.subr.mxu0 0.0
    %130 = vmatpush1.msra.mxu0 0.0
    %131 = vmatprep.subr.mxu0 0.0
    %132 = vmatpush1.msra.mxu0 0.0
    %133 = vmatprep.subr.mxu0 0.0
    %134 = vmatpush1.msra.mxu0 0.0
    %135 = vmatprep.subr.mxu0 0.0
    %136 = vmatpush1.msra.mxu0 0.0
    %137 = vmatprep.subr.mxu0 0.0
    %138 = vmatpush1.msra.mxu0 0.0
    %139 = vmatprep.subr.mxu0 0.0
    %140 = vmatpush1.msra.mxu0 0.0
    %141 = vmatprep.mubr.f32.mxu0 0.0
    %v142 = vand.u32 %v74, 4294901760
    %v143 = vsub.f32 %v74, %v142
    %v144 = vand.u32 %v143, 4294901760
    %v145 = vsub.f32 %v143, %v144
    %v146 = vand.u32 %v145, 4294901760
    %147 = vmatmul.mubr.f32.gmra.mrb[0].mxu0 %v146
    %v148 = vpop.f32.mrb[0].mxu0
    %v149 = vadd.f32 %v71, %v148
    %v150 = vpop.f32.mrb[0].mxu0
    %151 = vdwg.mxu0
    %152 = vmatprep.subr.mxu0 0.0
    %v153 = vand.u32 %v67, 4294901760
    %v154 = vsub.f32 %v67, %v153
    %v155 = vand.u32 %v154, 4294901760
    %v156 = vsub.f32 %v154, %v155
    %v157 = vand.u32 %v156, 4294901760
    %158 = vmatpush1.msra.mxu0 %v157
    %159 = vmatprep.subr.mxu0 0.0
    %160 = vmatpush1.msra.mxu0 0.0
    %161 = vmatprep.subr.mxu0 0.0
    %162 = vmatpush1.msra.mxu0 0.0
    %163 = vmatprep.subr.mxu0 0.0
    %164 = vmatpush1.msra.mxu0 0.0
    %165 = vmatprep.subr.mxu0 0.0
    %166 = vmatpush1.msra.mxu0 0.0
    %167 = vmatprep.subr.mxu0 0.0
    %168 = vmatpush1.msra.mxu0 0.0
    %169 = vmatprep.subr.mxu0 0.0
    %170 = vmatpush1.msra.mxu0 0.0
    %171 = vmatprep.subr.mxu0 0.0
    %172 = vmatpush1.msra.mxu0 0.0
    %173 = vmatprep.subr.mxu0 0.0
    %174 = vmatpush1.msra.mxu0 0.0
    %175 = vmatprep.subr.mxu0 0.0
    %176 = vmatpush1.msra.mxu0 0.0
    %177 = vmatprep.subr.mxu0 0.0
    %178 = vmatpush1.msra.mxu0 0.0
    %179 = vmatprep.subr.mxu0 0.0
    %180 = vmatpush1.msra.mxu0 0.0
    %181 = vmatprep.subr.mxu0 0.0
    %182 = vmatpush1.msra.mxu0 0.0
    %183 = vmatprep.subr.mxu0 0.0
    %184 = vmatpush1.msra.mxu0 0.0
    %185 = vmatprep.subr.mxu0 0.0
    %186 = vmatpush1.msra.mxu0 0.0
    %187 = vmatprep.subr.mxu0 0.0
    %188 = vmatpush1.msra.mxu0 0.0
    %189 = vmatprep.subr.mxu0 0.0
    %190 = vmatpush1.msra.mxu0 0.0
    %191 = vmatprep.subr.mxu0 0.0
    %192 = vmatpush1.msra.mxu0 0.0
    %193 = vmatprep.subr.mxu0 0.0
    %194 = vmatpush1.msra.mxu0 0.0
    %195 = vmatprep.subr.mxu0 0.0
    %196 = vmatpush1.msra.mxu0 0.0
    %197 = vmatprep.subr.mxu0 0.0
    %198 = vmatpush1.msra.mxu0 0.0
    %199 = vmatprep.subr.mxu0 0.0
    %200 = vmatpush1.msra.mxu0 0.0
    %201 = vmatprep.subr.mxu0 0.0
    %202 = vmatpush1.msra.mxu0 0.0
    %203 = vmatprep.subr.mxu0 0.0
    %204 = vmatpush1.msra.mxu0 0.0
    %205 = vmatprep.subr.mxu0 0.0
    %206 = vmatpush1.msra.mxu0 0.0
    %207 = vmatprep.subr.mxu0 0.0
    %208 = vmatpush1.msra.mxu0 0.0
    %209 = vmatprep.subr.mxu0 0.0
    %210 = vmatpush1.msra.mxu0 0.0
    %211 = vmatprep.subr.mxu0 0.0
    %212 = vmatpush1.msra.mxu0 0.0
    %213 = vmatprep.subr.mxu0 0.0
    %214 = vmatpush1.msra.mxu0 0.0
    %215 = vmatprep.subr.mxu0 0.0
    %216 = vmatpush1.msra.mxu0 0.0
    %217 = vmatprep.subr.mxu0 0.0
    %218 = vmatpush1.msra.mxu0 0.0
    %219 = vmatprep.subr.mxu0 0.0
    %220 = vmatpush1.msra.mxu0 0.0
    %221 = vmatprep.mubr.f32.mxu0 0.0
    %v222 = vand.u32 %v74, 4294901760
    %223 = vmatmul.mubr.f32.gmra.mrb[0].mxu0 %v222
    %v224 = vpop.f32.mrb[0].mxu0
    %v225 = vadd.f32 %v149, %v224
    %v226 = vpop.f32.mrb[0].mxu0
    %227 = vdwg.mxu0
    %228 = vmatprep.subr.mxu0 0.0
    %v229 = vand.u32 %v67, 4294901760
    %v230 = vsub.f32 %v67, %v229
    %231 = vmatpush1.msra.mxu0 %v230
    %232 = vmatprep.subr.mxu0 0.0
    %233 = vmatpush1.msra.mxu0 0.0
    %234 = vmatprep.subr.mxu0 0.0
    %235 = vmatpush1.msra.mxu0 0.0
    %236 = vmatprep.subr.mxu0 0.0
    %237 = vmatpush1.msra.mxu0 0.0
    %238 = vmatprep.subr.mxu0 0.0
    %239 = vmatpush1.msra.mxu0 0.0
    %240 = vmatprep.subr.mxu0 0.0
    %241 = vmatpush1.msra.mxu0 0.0
    %242 = vmatprep.subr.mxu0 0.0
    %243 = vmatpush1.msra.mxu0 0.0
    %244 = vmatprep.subr.mxu0 0.0
    %245 = vmatpush1.msra.mxu0 0.0
    %246 = vmatprep.subr.mxu0 0.0
    %247 = vmatpush1.msra.mxu0 0.0
    %248 = vmatprep.subr.mxu0 0.0
    %249 = vmatpush1.msra.mxu0 0.0
    %250 = vmatprep.subr.mxu0 0.0
    %251 = vmatpush1.msra.mxu0 0.0
    %252 = vmatprep.subr.mxu0 0.0
    %253 = vmatpush1.msra.mxu0 0.0
    %254 = vmatprep.subr.mxu0 0.0
    %255 = vmatpush1.msra.mxu0 0.0
    %256 = vmatprep.subr.mxu0 0.0
    %257 = vmatpush1.msra.mxu0 0.0
    %258 = vmatprep.subr.mxu0 0.0
    %259 = vmatpush1.msra.mxu0 0.0
    %260 = vmatprep.subr.mxu0 0.0
    %261 = vmatpush1.msra.mxu0 0.0
    %262 = vmatprep.subr.mxu0 0.0
    %263 = vmatpush1.msra.mxu0 0.0
    %264 = vmatprep.subr.mxu0 0.0
    %265 = vmatpush1.msra.mxu0 0.0
    %266 = vmatprep.subr.mxu0 0.0
    %267 = vmatpush1.msra.mxu0 0.0
    %268 = vmatprep.subr.mxu0 0.0
    %269 = vmatpush1.msra.mxu0 0.0
    %270 = vmatprep.subr.mxu0 0.0
    %271 = vmatpush1.msra.mxu0 0.0
    %272 = vmatprep.subr.mxu0 0.0
    %273 = vmatpush1.msra.mxu0 0.0
    %274 = vmatprep.subr.mxu0 0.0
    %275 = vmatpush1.msra.mxu0 0.0
    %276 = vmatprep.subr.mxu0 0.0
    %277 = vmatpush1.msra.mxu0 0.0
    %278 = vmatprep.subr.mxu0 0.0
    %279 = vmatpush1.msra.mxu0 0.0
    %280 = vmatprep.subr.mxu0 0.0
    %281 = vmatpush1.msra.mxu0 0.0
    %282 = vmatprep.subr.mxu0 0.0
    %283 = vmatpush1.msra.mxu0 0.0
    %284 = vmatprep.subr.mxu0 0.0
    %285 = vmatpush1.msra.mxu0 0.0
    %286 = vmatprep.subr.mxu0 0.0
    %287 = vmatpush1.msra.mxu0 0.0
    %288 = vmatprep.subr.mxu0 0.0
    %289 = vmatpush1.msra.mxu0 0.0
    %290 = vmatprep.subr.mxu0 0.0
    %291 = vmatpush1.msra.mxu0 0.0
    %292 = vmatprep.subr.mxu0 0.0
    %293 = vmatpush1.msra.mxu0 0.0
    %294 = vmatprep.mubr.f32.mxu0 0.0
    %v295 = vand.u32 %v74, 4294901760
    %v296 = vsub.f32 %v74, %v295
    %297 = vmatmul.mubr.f32.gmra.mrb[0].mxu0 %v296
    %v298 = vpop.f32.mrb[0].mxu0
    %v299 = vadd.f32 %v225, %v298
    %v300 = vpop.f32.mrb[0].mxu0
    %301 = vdwg.mxu0
    %302 = vmatprep.subr.mxu0 0.0
    %v303 = vand.u32 %v67, 4294901760
    %304 = vmatpush1.msra.mxu0 %v303
    %305 = vmatprep.subr.mxu0 0.0
    %306 = vmatpush1.msra.mxu0 0.0
    %307 = vmatprep.subr.mxu0 0.0
    %308 = vmatpush1.msra.mxu0 0.0
    %309 = vmatprep.subr.mxu0 0.0
    %310 = vmatpush1.msra.mxu0 0.0
    %311 = vmatprep.subr.mxu0 0.0
    %312 = vmatpush1.msra.mxu0 0.0
    %313 = vmatprep.subr.mxu0 0.0
    %314 = vmatpush1.msra.mxu0 0.0
    %315 = vmatprep.subr.mxu0 0.0
    %316 = vmatpush1.msra.mxu0 0.0
    %317 = vmatprep.subr.mxu0 0.0
    %318 = vmatpush1.msra.mxu0 0.0
    %319 = vmatprep.subr.mxu0 0.0
    %320 = vmatpush1.msra.mxu0 0.0
    %321 = vmatprep.subr.mxu0 0.0
    %322 = vmatpush1.msra.mxu0 0.0
    %323 = vmatprep.subr.mxu0 0.0
    %324 = vmatpush1.msra.mxu0 0.0
    %325 = vmatprep.subr.mxu0 0.0
    %326 = vmatpush1.msra.mxu0 0.0
    %327 = vmatprep.subr.mxu0 0.0
    %328 = vmatpush1.msra.mxu0 0.0
    %329 = vmatprep.subr.mxu0 0.0
    %330 = vmatpush1.msra.mxu0 0.0
    %331 = vmatprep.subr.mxu0 0.0
    %332 = vmatpush1.msra.mxu0 0.0
    %333 = vmatprep.subr.mxu0 0.0
    %334 = vmatpush1.msra.mxu0 0.0
    %335 = vmatprep.subr.mxu0 0.0
    %336 = vmatpush1.msra.mxu0 0.0
    %337 = vmatprep.subr.mxu0 0.0
    %338 = vmatpush1.msra.mxu0 0.0
    %339 = vmatprep.subr.mxu0 0.0
    %340 = vmatpush1.msra.mxu0 0.0
    %341 = vmatprep.subr.mxu0 0.0
    %342 = vmatpush1.msra.mxu0 0.0
    %343 = vmatprep.subr.mxu0 0.0
    %344 = vmatpush1.msra.mxu0 0.0
    %345 = vmatprep.subr.mxu0 0.0
    %346 = vmatpush1.msra.mxu0 0.0
    %347 = vmatprep.subr.mxu0 0.0
    %348 = vmatpush1.msra.mxu0 0.0
    %349 = vmatprep.subr.mxu0 0.0
    %350 = vmatpush1.msra.mxu0 0.0
    %351 = vmatprep.subr.mxu0 0.0
    %352 = vmatpush1.msra.mxu0 0.0
    %353 = vmatprep.subr.mxu0 0.0
    %354 = vmatpush1.msra.mxu0 0.0
    %355 = vmatprep.subr.mxu0 0.0
    %356 = vmatpush1.msra.mxu0 0.0
    %357 = vmatprep.subr.mxu0 0.0
    %358 = vmatpush1.msra.mxu0 0.0
    %359 = vmatprep.subr.mxu0 0.0
    %360 = vmatpush1.msra.mxu0 0.0
    %361 = vmatprep.subr.mxu0 0.0
    %362 = vmatpush1.msra.mxu0 0.0
    %363 = vmatprep.subr.mxu0 0.0
    %364 = vmatpush1.msra.mxu0 0.0
    %365 = vmatprep.subr.mxu0 0.0
    %366 = vmatpush1.msra.mxu0 0.0
    %367 = vmatprep.mubr.f32.mxu0 0.0
    %v368 = vand.u32 %v74, 4294901760
    %v369 = vsub.f32 %v74, %v368
    %v370 = vand.u32 %v369, 4294901760
    %371 = vmatmul.mubr.f32.gmra.mrb[0].mxu0 %v370
    %v372 = vpop.f32.mrb[0].mxu0
    %v373 = vadd.f32 %v299, %v372
    %v374 = vpop.f32.mrb[0].mxu0
    %375 = vdwg.mxu0
    %376 = vmatprep.subr.mxu0 0.0
    %v377 = vand.u32 %v67, 4294901760
    %v378 = vsub.f32 %v67, %v377
    %v379 = vand.u32 %v378, 4294901760
    %380 = vmatpush1.msra.mxu0 %v379
    %381 = vmatprep.subr.mxu0 0.0
    %382 = vmatpush1.msra.mxu0 0.0
    %383 = vmatprep.subr.mxu0 0.0
    %384 = vmatpush1.msra.mxu0 0.0
    %385 = vmatprep.subr.mxu0 0.0
    %386 = vmatpush1.msra.mxu0 0.0
    %387 = vmatprep.subr.mxu0 0.0
    %388 = vmatpush1.msra.mxu0 0.0
    %389 = vmatprep.subr.mxu0 0.0
    %390 = vmatpush1.msra.mxu0 0.0
    %391 = vmatprep.subr.mxu0 0.0
    %392 = vmatpush1.msra.mxu0 0.0
    %393 = vmatprep.subr.mxu0 0.0
    %394 = vmatpush1.msra.mxu0 0.0
    %395 = vmatprep.subr.mxu0 0.0
    %396 = vmatpush1.msra.mxu0 0.0
    %397 = vmatprep.subr.mxu0 0.0
    %398 = vmatpush1.msra.mxu0 0.0
    %399 = vmatprep.subr.mxu0 0.0
    %400 = vmatpush1.msra.mxu0 0.0
    %401 = vmatprep.subr.mxu0 0.0
    %402 = vmatpush1.msra.mxu0 0.0
    %403 = vmatprep.subr.mxu0 0.0
    %404 = vmatpush1.msra.mxu0 0.0
    %405 = vmatprep.subr.mxu0 0.0
    %406 = vmatpush1.msra.mxu0 0.0
    %407 = vmatprep.subr.mxu0 0.0
    %408 = vmatpush1.msra.mxu0 0.0
    %409 = vmatprep.subr.mxu0 0.0
    %410 = vmatpush1.msra.mxu0 0.0
    %411 = vmatprep.subr.mxu0 0.0
    %412 = vmatpush1.msra.mxu0 0.0
    %413 = vmatprep.subr.mxu0 0.0
    %414 = vmatpush1.msra.mxu0 0.0
    %415 = vmatprep.subr.mxu0 0.0
    %416 = vmatpush1.msra.mxu0 0.0
    %417 = vmatprep.subr.mxu0 0.0
    %418 = vmatpush1.msra.mxu0 0.0
    %419 = vmatprep.subr.mxu0 0.0
    %420 = vmatpush1.msra.mxu0 0.0
    %421 = vmatprep.subr.mxu0 0.0
    %422 = vmatpush1.msra.mxu0 0.0
    %423 = vmatprep.subr.mxu0 0.0
    %424 = vmatpush1.msra.mxu0 0.0
    %425 = vmatprep.subr.mxu0 0.0
    %426 = vmatpush1.msra.mxu0 0.0
    %427 = vmatprep.subr.mxu0 0.0
    %428 = vmatpush1.msra.mxu0 0.0
    %429 = vmatprep.subr.mxu0 0.0
    %430 = vmatpush1.msra.mxu0 0.0
    %431 = vmatprep.subr.mxu0 0.0
    %432 = vmatpush1.msra.mxu0 0.0
    %433 = vmatprep.subr.mxu0 0.0
    %434 = vmatpush1.msra.mxu0 0.0
    %435 = vmatprep.subr.mxu0 0.0
    %436 = vmatpush1.msra.mxu0 0.0
    %437 = vmatprep.subr.mxu0 0.0
    %438 = vmatpush1.msra.mxu0 0.0
    %439 = vmatprep.subr.mxu0 0.0
    %440 = vmatpush1.msra.mxu0 0.0
    %441 = vmatprep.subr.mxu0 0.0
    %442 = vmatpush1.msra.mxu0 0.0
    %443 = vmatprep.mubr.f32.mxu0 0.0
    %v444 = vand.u32 %v74, 4294901760
    %445 = vmatmul.mubr.f32.gmra.mrb[0].mxu0 %v444
    %v446 = vpop.f32.mrb[0].mxu0
    %v447 = vadd.f32 %v373, %v446
    %v448 = vpop.f32.mrb[0].mxu0
    %449 = vdwg.mxu0
    %450 = vmatprep.subr.mxu0 0.0
    %v451 = vand.u32 %v67, 4294901760
    %452 = vmatpush1.msra.mxu0 %v451
    %453 = vmatprep.subr.mxu0 0.0
    %454 = vmatpush1.msra.mxu0 0.0
    %455 = vmatprep.subr.mxu0 0.0
    %456 = vmatpush1.msra.mxu0 0.0
    %457 = vmatprep.subr.mxu0 0.0
    %458 = vmatpush1.msra.mxu0 0.0
    %459 = vmatprep.subr.mxu0 0.0
    %460 = vmatpush1.msra.mxu0 0.0
    %461 = vmatprep.subr.mxu0 0.0
    %462 = vmatpush1.msra.mxu0 0.0
    %463 = vmatprep.subr.mxu0 0.0
    %464 = vmatpush1.msra.mxu0 0.0
    %465 = vmatprep.subr.mxu0 0.0
    %466 = vmatpush1.msra.mxu0 0.0
    %467 = vmatprep.subr.mxu0 0.0
    %468 = vmatpush1.msra.mxu0 0.0
    %469 = vmatprep.subr.mxu0 0.0
    %470 = vmatpush1.msra.mxu0 0.0
    %471 = vmatprep.subr.mxu0 0.0
    %472 = vmatpush1.msra.mxu0 0.0
    %473 = vmatprep.subr.mxu0 0.0
    %474 = vmatpush1.msra.mxu0 0.0
    %475 = vmatprep.subr.mxu0 0.0
    %476 = vmatpush1.msra.mxu0 0.0
    %477 = vmatprep.subr.mxu0 0.0
    %478 = vmatpush1.msra.mxu0 0.0
    %479 = vmatprep.subr.mxu0 0.0
    %480 = vmatpush1.msra.mxu0 0.0
    %481 = vmatprep.subr.mxu0 0.0
    %482 = vmatpush1.msra.mxu0 0.0
    %483 = vmatprep.subr.mxu0 0.0
    %484 = vmatpush1.msra.mxu0 0.0
    %485 = vmatprep.subr.mxu0 0.0
    %486 = vmatpush1.msra.mxu0 0.0
    %487 = vmatprep.subr.mxu0 0.0
    %488 = vmatpush1.msra.mxu0 0.0
    %489 = vmatprep.subr.mxu0 0.0
    %490 = vmatpush1.msra.mxu0 0.0
    %491 = vmatprep.subr.mxu0 0.0
    %492 = vmatpush1.msra.mxu0 0.0
    %493 = vmatprep.subr.mxu0 0.0
    %494 = vmatpush1.msra.mxu0 0.0
    %495 = vmatprep.subr.mxu0 0.0
    %496 = vmatpush1.msra.mxu0 0.0
    %497 = vmatprep.subr.mxu0 0.0
    %498 = vmatpush1.msra.mxu0 0.0
    %499 = vmatprep.subr.mxu0 0.0
    %500 = vmatpush1.msra.mxu0 0.0
    %501 = vmatprep.subr.mxu0 0.0
    %502 = vmatpush1.msra.mxu0 0.0
    %503 = vmatprep.subr.mxu0 0.0
    %504 = vmatpush1.msra.mxu0 0.0
    %505 = vmatprep.subr.mxu0 0.0
    %506 = vmatpush1.msra.mxu0 0.0
    %507 = vmatprep.subr.mxu0 0.0
    %508 = vmatpush1.msra.mxu0 0.0
    %509 = vmatprep.subr.mxu0 0.0
    %510 = vmatpush1.msra.mxu0 0.0
    %511 = vmatprep.subr.mxu0 0.0
    %512 = vmatpush1.msra.mxu0 0.0
    %513 = vmatprep.subr.mxu0 0.0
    %514 = vmatpush1.msra.mxu0 0.0
    %515 = vmatprep.mubr.f32.mxu0 0.0
    %v516 = vand.u32 %v74, 4294901760
    %517 = vmatmul.mubr.f32.gmra.mrb[0].mxu0 %v516
    %v518 = vpop.f32.mrb[0].mxu0
    %v519 = vadd.f32 %v447, %v518
    %v520 = vpop.f32.mrb[0].mxu0
    %521 = vdwg.mxu0
    %v522 = vmax.f32 %v519, 0.0
    %v523 = vld [vmem:[%s2] sm:$0xff]
    %v524 = vld [vmem:[%s2 + $0x8] sm:$0xff]
    %v525 = vld [vmem:[%s2 + $0x10] sm:$0xff]
    %v526 = vld [vmem:[%s2 + $0x18] sm:$0xff]
    %v527 = vld [vmem:[%s2 + $0x20] sm:$0xff]
    %v528 = vld [vmem:[%s2 + $0x28] sm:$0xff]
    %v529 = vld [vmem:[%s2 + $0x30] sm:$0xff]
    %v530 = vld [vmem:[%s2 + $0x38] sm:$0xff]
    %v531 = vld [vmem:[%s2 + $0x40] sm:$0xff]
    %v532 = vld [vmem:[%s2 + $0x48] sm:$0xff]
    %v533 = vld [vmem:[%s2 + $0x50] sm:$0xff]
    %v534 = vld [vmem:[%s2 + $0x58] sm:$0xff]
    %v535 = vld [vmem:[%s2 + $0x60] sm:$0xff]
    %v536 = vld [vmem:[%s2 + $0x68] sm:$0xff]
    %v537 = vld [vmem:[%s2 + $0x70] sm:$0xff]
    %v538 = vld [vmem:[%s2 + $0x78] sm:$0xff]
    %v539 = vlaneseq
    %v540 = vshrl.u32 %v539, 7
    %v541 = vsub.s32 1, %v540
    %v542 = vrot.slane %v65, %v541
    %543 = vmatprep.subr.mxu0 0.0
    %v544 = vand.u32 %v523, 4294901760
    %545 = vmatpush1.msra.mxu0 %v544
    %546 = vmatprep.subr.mxu0 0.0
    %v547 = vand.u32 %v524, 4294901760
    %548 = vmatpush1.msra.mxu0 %v547
    %549 = vmatprep.subr.mxu0 0.0
    %v550 = vand.u32 %v525, 4294901760
    %551 = vmatpush1.msra.mxu0 %v550
    %552 = vmatprep.subr.mxu0 0.0
    %v553 = vand.u32 %v526, 4294901760
    %554 = vmatpush1.msra.mxu0 %v553
    %555 = vmatprep.subr.mxu0 0.0
    %v556 = vand.u32 %v527, 4294901760
    %557 = vmatpush1.msra.mxu0 %v556
    %558 = vmatprep.subr.mxu0 0.0
    %v559 = vand.u32 %v528, 4294901760
    %560 = vmatpush1.msra.mxu0 %v559
    %561 = vmatprep.subr.mxu0 0.0
    %v562 = vand.u32 %v529, 4294901760
    %563 = vmatpush1.msra.mxu0 %v562
    %564 = vmatprep.subr.mxu0 0.0
    %v565 = vand.u32 %v530, 4294901760
    %566 = vmatpush1.msra.mxu0 %v565
    %567 = vmatprep.subr.mxu0 0.0
    %v568 = vand.u32 %v531, 4294901760
    %569 = vmatpush1.msra.mxu0 %v568
    %570 = vmatprep.subr.mxu0 0.0
    %v571 = vand.u32 %v532, 4294901760
    %572 = vmatpush1.msra.mxu0 %v571
    %573 = vmatprep.subr.mxu0 0.0
    %v574 = vand.u32 %v533, 4294901760
    %575 = vmatpush1.msra.mxu0 %v574
    %576 = vmatprep.subr.mxu0 0.0
    %v577 = vand.u32 %v534, 4294901760
    %578 = vmatpush1.msra.mxu0 %v577
    %579 = vmatprep.subr.mxu0 0.0
    %v580 = vand.u32 %v535, 4294901760
    %581 = vmatpush1.msra.mxu0 %v580
    %582 = vmatprep.subr.mxu0 0.0
    %v583 = vand.u32 %v536, 4294901760
    %584 = vmatpush1.msra.mxu0 %v583
    %585 = vmatprep.subr.mxu0 0.0
    %v586 = vand.u32 %v537, 4294901760
    %587 = vmatpush1.msra.mxu0 %v586
    %588 = vmatprep.subr.mxu0 0.0
    %v589 = vand.u32 %v538, 4294901760
    %590 = vmatpush1.msra.mxu0 %v589
    %591 = vmatprep.subr.mxu0 0.0
    %592 = vmatpush1.msra.mxu0 0.0
    %593 = vmatprep.subr.mxu0 0.0
    %594 = vmatpush1.msra.mxu0 0.0
    %595 = vmatprep.subr.mxu0 0.0
    %596 = vmatpush1.msra.mxu0 0.0
    %597 = vmatprep.subr.mxu0 0.0
    %598 = vmatpush1.msra.mxu0 0.0
    %599 = vmatprep.subr.mxu0 0.0
    %600 = vmatpush1.msra.mxu0 0.0
    %601 = vmatprep.subr.mxu0 0.0
    %602 = vmatpush1.msra.mxu0 0.0
    %603 = vmatprep.subr.mxu0 0.0
    %604 = vmatpush1.msra.mxu0 0.0
    %605 = vmatprep.subr.mxu0 0.0
    %606 = vmatpush1.msra.mxu0 0.0
    %607 = vmatprep.subr.mxu0 0.0
    %608 = vmatpush1.msra.mxu0 0.0
    %609 = vmatprep.subr.mxu0 0.0
    %610 = vmatpush1.msra.mxu0 0.0
    %611 = vmatprep.subr.mxu0 0.0
    %612 = vmatpush1.msra.mxu0 0.0
    %613 = vmatprep.subr.mxu0 0.0
    %614 = vmatpush1.msra.mxu0 0.0
    %615 = vmatprep.subr.mxu0 0.0
    %616 = vmatpush1.msra.mxu0 0.0
    %617 = vmatprep.subr.mxu0 0.0
    %618 = vmatpush1.msra.mxu0 0.0
    %619 = vmatprep.subr.mxu0 0.0
    %620 = vmatpush1.msra.mxu0 0.0
    %621 = vmatprep.subr.mxu0 0.0
    %622 = vmatpush1.msra.mxu0 0.0
    %623 = vmatprep.mubr.f32.mxu0 0.0
    %v624 = vand.u32 %v522, 4294901760
    %v625 = vsub.f32 %v522, %v624
    %v626 = vand.u32 %v625, 4294901760
    %v627 = vsub.f32 %v625, %v626
    %v628 = vand.u32 %v627, 4294901760
    %629 = vmatmul.mubr.f32.gmra.mrb[0].mxu0 %v628
    %v630 = vpop.f32.mrb[0].mxu0
    %v631 = vadd.f32 %v542, %v630
    %v632 = vpop.f32.mrb[0].mxu0
    %633 = vdwg.mxu0
    %634 = vmatprep.subr.mxu0 0.0
    %v635 = vand.u32 %v523, 4294901760
    %v636 = vsub.f32 %v523, %v635
    %v637 = vand.u32 %v636, 4294901760
    %v638 = vsub.f32 %v636, %v637
    %v639 = vand.u32 %v638, 4294901760
    %640 = vmatpush1.msra.mxu0 %v639
    %641 = vmatprep.subr.mxu0 0.0
    %v642 = vand.u32 %v524, 4294901760
    %v643 = vsub.f32 %v524, %v642
    %v644 = vand.u32 %v643, 4294901760
    %v645 = vsub.f32 %v643, %v644
    %v646 = vand.u32 %v645, 4294901760
    %647 = vmatpush1.msra.mxu0 %v646
    %648 = vmatprep.subr.mxu0 0.0
    %v649 = vand.u32 %v525, 4294901760
    %v650 = vsub.f32 %v525, %v649
    %v651 = vand.u32 %v650, 4294901760
    %v652 = vsub.f32 %v650, %v651
    %v653 = vand.u32 %v652, 4294901760
    %654 = vmatpush1.msra.mxu0 %v653
    %655 = vmatprep.subr.mxu0 0.0
    %v656 = vand.u32 %v526, 4294901760
    %v657 = vsub.f32 %v526, %v656
    %v658 = vand.u32 %v657, 4294901760
    %v659 = vsub.f32 %v657, %v658
    %v660 = vand.u32 %v659, 4294901760
    %661 = vmatpush1.msra.mxu0 %v660
    %662 = vmatprep.subr.mxu0 0.0
    %v663 = vand.u32 %v527, 4294901760
    %v664 = vsub.f32 %v527, %v663
    %v665 = vand.u32 %v664, 4294901760
    %v666 = vsub.f32 %v664, %v665
    %v667 = vand.u32 %v666, 4294901760
    %668 = vmatpush1.msra.mxu0 %v667
    %669 = vmatprep.subr.mxu0 0.0
    %v670 = vand.u32 %v528, 4294901760
    %v671 = vsub.f32 %v528, %v670
    %v672 = vand.u32 %v671, 4294901760
    %v673 = vsub.f32 %v671, %v672
    %v674 = vand.u32 %v673, 4294901760
    %675 = vmatpush1.msra.mxu0 %v674
    %676 = vmatprep.subr.mxu0 0.0
    %v677 = vand.u32 %v529, 4294901760
    %v678 = vsub.f32 %v529, %v677
    %v679 = vand.u32 %v678, 4294901760
    %v680 = vsub.f32 %v678, %v679
    %v681 = vand.u32 %v680, 4294901760
    %682 = vmatpush1.msra.mxu0 %v681
    %683 = vmatprep.subr.mxu0 0.0
    %v684 = vand.u32 %v530, 4294901760
    %v685 = vsub.f32 %v530, %v684
    %v686 = vand.u32 %v685, 4294901760
    %v687 = vsub.f32 %v685, %v686
    %v688 = vand.u32 %v687, 4294901760
    %689 = vmatpush1.msra.mxu0 %v688
    %690 = vmatprep.subr.mxu0 0.0
    %v691 = vand.u32 %v531, 4294901760
    %v692 = vsub.f32 %v531, %v691
    %v693 = vand.u32 %v692, 4294901760
    %v694 = vsub.f32 %v692, %v693
    %v695 = vand.u32 %v694, 4294901760
    %696 = vmatpush1.msra.mxu0 %v695
    %697 = vmatprep.subr.mxu0 0.0
    %v698 = vand.u32 %v532, 4294901760
    %v699 = vsub.f32 %v532, %v698
    %v700 = vand.u32 %v699, 4294901760
    %v701 = vsub.f32 %v699, %v700
    %v702 = vand.u32 %v701, 4294901760
    %703 = vmatpush1.msra.mxu0 %v702
    %704 = vmatprep.subr.mxu0 0.0
    %v705 = vand.u32 %v533, 4294901760
    %v706 = vsub.f32 %v533, %v705
    %v707 = vand.u32 %v706, 4294901760
    %v708 = vsub.f32 %v706, %v707
    %v709 = vand.u32 %v708, 4294901760
    %710 = vmatpush1.msra.mxu0 %v709
    %711 = vmatprep.subr.mxu0 0.0
    %v712 = vand.u32 %v534, 4294901760
    %v713 = vsub.f32 %v534, %v712
    %v714 = vand.u32 %v713, 4294901760
    %v715 = vsub.f32 %v713, %v714
    %v716 = vand.u32 %v715, 4294901760
    %717 = vmatpush1.msra.mxu0 %v716
    %718 = vmatprep.subr.mxu0 0.0
    %v719 = vand.u32 %v535, 4294901760
    %v720 = vsub.f32 %v535, %v719
    %v721 = vand.u32 %v720, 4294901760
    %v722 = vsub.f32 %v720, %v721
    %v723 = vand.u32 %v722, 4294901760
    %724 = vmatpush1.msra.mxu0 %v723
    %725 = vmatprep.subr.mxu0 0.0
    %v726 = vand.u32 %v536, 4294901760
    %v727 = vsub.f32 %v536, %v726
    %v728 = vand.u32 %v727, 4294901760
    %v729 = vsub.f32 %v727, %v728
    %v730 = vand.u32 %v729, 4294901760
    %731 = vmatpush1.msra.mxu0 %v730
    %732 = vmatprep.subr.mxu0 0.0
    %v733 = vand.u32 %v537, 4294901760
    %v734 = vsub.f32 %v537, %v733
    %v735 = vand.u32 %v734, 4294901760
    %v736 = vsub.f32 %v734, %v735
    %v737 = vand.u32 %v736, 4294901760
    %738 = vmatpush1.msra.mxu0 %v737
    %739 = vmatprep.subr.mxu0 0.0
    %v740 = vand.u32 %v538, 4294901760
    %v741 = vsub.f32 %v538, %v740
    %v742 = vand.u32 %v741, 4294901760
    %v743 = vsub.f32 %v741, %v742
    %v744 = vand.u32 %v743, 4294901760
    %745 = vmatpush1.msra.mxu0 %v744
    %746 = vmatprep.subr.mxu0 0.0
    %747 = vmatpush1.msra.mxu0 0.0
    %748 = vmatprep.subr.mxu0 0.0
    %749 = vmatpush1.msra.mxu0 0.0
    %750 = vmatprep.subr.mxu0 0.0
    %751 = vmatpush1.msra.mxu0 0.0
    %752 = vmatprep.subr.mxu0 0.0
    %753 = vmatpush1.msra.mxu0 0.0
    %754 = vmatprep.subr.mxu0 0.0
    %755 = vmatpush1.msra.mxu0 0.0
    %756 = vmatprep.subr.mxu0 0.0
    %757 = vmatpush1.msra.mxu0 0.0
    %758 = vmatprep.subr.mxu0 0.0
    %759 = vmatpush1.msra.mxu0 0.0
    %760 = vmatprep.subr.mxu0 0.0
    %761 = vmatpush1.msra.mxu0 0.0
    %762 = vmatprep.subr.mxu0 0.0
    %763 = vmatpush1.msra.mxu0 0.0
    %764 = vmatprep.subr.mxu0 0.0
    %765 = vmatpush1.msra.mxu0 0.0
    %766 = vmatprep.subr.mxu0 0.0
    %767 = vmatpush1.msra.mxu0 0.0
    %768 = vmatprep.subr.mxu0 0.0
    %769 = vmatpush1.msra.mxu0 0.0
    %770 = vmatprep.subr.mxu0 0.0
    %771 = vmatpush1.msra.mxu0 0.0
    %772 = vmatprep.subr.mxu0 0.0
    %773 = vmatpush1.msra.mxu0 0.0
    %774 = vmatprep.subr.mxu0 0.0
    %775 = vmatpush1.msra.mxu0 0.0
    %776 = vmatprep.subr.mxu0 0.0
    %777 = vmatpush1.msra.mxu0 0.0
    %778 = vmatprep.mubr.f32.mxu0 0.0
    %v779 = vand.u32 %v522, 4294901760
    %780 = vmatmul.mubr.f32.gmra.mrb[0].mxu0 %v779
    %v781 = vpop.f32.mrb[0].mxu0
    %v782 = vadd.f32 %v631, %v781
    %v783 = vpop.f32.mrb[0].mxu0
    %784 = vdwg.mxu0
    %785 = vmatprep.subr.mxu0 0.0
    %v786 = vand.u32 %v523, 4294901760
    %v787 = vsub.f32 %v523, %v786
    %788 = vmatpush1.msra.mxu0 %v787
    %789 = vmatprep.subr.mxu0 0.0
    %v790 = vand.u32 %v524, 4294901760
    %v791 = vsub.f32 %v524, %v790
    %792 = vmatpush1.msra.mxu0 %v791
    %793 = vmatprep.subr.mxu0 0.0
    %v794 = vand.u32 %v525, 4294901760
    %v795 = vsub.f32 %v525, %v794
    %796 = vmatpush1.msra.mxu0 %v795
    %797 = vmatprep.subr.mxu0 0.0
    %v798 = vand.u32 %v526, 4294901760
    %v799 = vsub.f32 %v526, %v798
    %800 = vmatpush1.msra.mxu0 %v799
    %801 = vmatprep.subr.mxu0 0.0
    %v802 = vand.u32 %v527, 4294901760
    %v803 = vsub.f32 %v527, %v802
    %804 = vmatpush1.msra.mxu0 %v803
    %805 = vmatprep.subr.mxu0 0.0
    %v806 = vand.u32 %v528, 4294901760
    %v807 = vsub.f32 %v528, %v806
    %808 = vmatpush1.msra.mxu0 %v807
    %809 = vmatprep.subr.mxu0 0.0
    %v810 = vand.u32 %v529, 4294901760
    %v811 = vsub.f32 %v529, %v810
    %812 = vmatpush1.msra.mxu0 %v811
    %813 = vmatprep.subr.mxu0 0.0
    %v814 = vand.u32 %v530, 4294901760
    %v815 = vsub.f32 %v530, %v814
    %816 = vmatpush1.msra.mxu0 %v815
    %817 = vmatprep.subr.mxu0 0.0
    %v818 = vand.u32 %v531, 4294901760
    %v819 = vsub.f32 %v531, %v818
    %820 = vmatpush1.msra.mxu0 %v819
    %821 = vmatprep.subr.mxu0 0.0
    %v822 = vand.u32 %v532, 4294901760
    %v823 = vsub.f32 %v532, %v822
    %824 = vmatpush1.msra.mxu0 %v823
    %825 = vmatprep.subr.mxu0 0.0
    %v826 = vand.u32 %v533, 4294901760
    %v827 = vsub.f32 %v533, %v826
    %828 = vmatpush1.msra.mxu0 %v827
    %829 = vmatprep.subr.mxu0 0.0
    %v830 = vand.u32 %v534, 4294901760
    %v831 = vsub.f32 %v534, %v830
    %832 = vmatpush1.msra.mxu0 %v831
    %833 = vmatprep.subr.mxu0 0.0
    %v834 = vand.u32 %v535, 4294901760
    %v835 = vsub.f32 %v535, %v834
    %836 = vmatpush1.msra.mxu0 %v835
    %837 = vmatprep.subr.mxu0 0.0
    %v838 = vand.u32 %v536, 4294901760
    %v839 = vsub.f32 %v536, %v838
    %840 = vmatpush1.msra.mxu0 %v839
    %841 = vmatprep.subr.mxu0 0.0
    %v842 = vand.u32 %v537, 4294901760
    %v843 = vsub.f32 %v537, %v842
    %844 = vmatpush1.msra.mxu0 %v843
    %845 = vmatprep.subr.mxu0 0.0
    %v846 = vand.u32 %v538, 4294901760
    %v847 = vsub.f32 %v538, %v846
    %848 = vmatpush1.msra.mxu0 %v847
    %849 = vmatprep.subr.mxu0 0.0
    %850 = vmatpush1.msra.mxu0 0.0
    %851 = vmatprep.subr.mxu0 0.0
    %852 = vmatpush1.msra.mxu0 0.0
    %853 = vmatprep.subr.mxu0 0.0
    %854 = vmatpush1.msra.mxu0 0.0
    %855 = vmatprep.subr.mxu0 0.0
    %856 = vmatpush1.msra.mxu0 0.0
    %857 = vmatprep.subr.mxu0 0.0
    %858 = vmatpush1.msra.mxu0 0.0
    %859 = vmatprep.subr.mxu0 0.0
    %860 = vmatpush1.msra.mxu0 0.0
    %861 = vmatprep.subr.mxu0 0.0
    %862 = vmatpush1.msra.mxu0 0.0
    %863 = vmatprep.subr.mxu0 0.0
    %864 = vmatpush1.msra.mxu0 0.0
    %865 = vmatprep.subr.mxu0 0.0
    %866 = vmatpush1.msra.mxu0 0.0
    %867 = vmatprep.subr.mxu0 0.0
    %868 = vmatpush1.msra.mxu0 0.0
    %869 = vmatprep.subr.mxu0 0.0
    %870 = vmatpush1.msra.mxu0 0.0
    %871 = vmatprep.subr.mxu0 0.0
    %872 = vmatpush1.msra.mxu0 0.0
    %873 = vmatprep.subr.mxu0 0.0
    %874 = vmatpush1.msra.mxu0 0.0
    %875 = vmatprep.subr.mxu0 0.0
    %876 = vmatpush1.msra.mxu0 0.0
    %877 = vmatprep.subr.mxu0 0.0
    %878 = vmatpush1.msra.mxu0 0.0
    %879 = vmatprep.subr.mxu0 0.0
    %880 = vmatpush1.msra.mxu0 0.0
    %881 = vmatprep.mubr.f32.mxu0 0.0
    %v882 = vand.u32 %v522, 4294901760
    %v883 = vsub.f32 %v522, %v882
    %884 = vmatmul.mubr.f32.gmra.mrb[0].mxu0 %v883
    %v885 = vpop.f32.mrb[0].mxu0
    %v886 = vadd.f32 %v782, %v885
    %v887 = vpop.f32.mrb[0].mxu0
    %888 = vdwg.mxu0
    %889 = vmatprep.subr.mxu0 0.0
    %v890 = vand.u32 %v523, 4294901760
    %891 = vmatpush1.msra.mxu0 %v890
    %892 = vmatprep.subr.mxu0 0.0
    %v893 = vand.u32 %v524, 4294901760
    %894 = vmatpush1.msra.mxu0 %v893
    %895 = vmatprep.subr.mxu0 0.0
    %v896 = vand.u32 %v525, 4294901760
    %897 = vmatpush1.msra.mxu0 %v896
    %898 = vmatprep.subr.mxu0 0.0
    %v899 = vand.u32 %v526, 4294901760
    %900 = vmatpush1.msra.mxu0 %v899
    %901 = vmatprep.subr.mxu0 0.0
    %v902 = vand.u32 %v527, 4294901760
    %903 = vmatpush1.msra.mxu0 %v902
    %904 = vmatprep.subr.mxu0 0.0
    %v905 = vand.u32 %v528, 4294901760
    %906 = vmatpush1.msra.mxu0 %v905
    %907 = vmatprep.subr.mxu0 0.0
    %v908 = vand.u32 %v529, 4294901760
    %909 = vmatpush1.msra.mxu0 %v908
    %910 = vmatprep.subr.mxu0 0.0
    %v911 = vand.u32 %v530, 4294901760
    %912 = vmatpush1.msra.mxu0 %v911
    %913 = vmatprep.subr.mxu0 0.0
    %v914 = vand.u32 %v531, 4294901760
    %915 = vmatpush1.msra.mxu0 %v914
    %916 = vmatprep.subr.mxu0 0.0
    %v917 = vand.u32 %v532, 4294901760
    %918 = vmatpush1.msra.mxu0 %v917
    %919 = vmatprep.subr.mxu0 0.0
    %v920 = vand.u32 %v533, 4294901760
    %921 = vmatpush1.msra.mxu0 %v920
    %922 = vmatprep.subr.mxu0 0.0
    %v923 = vand.u32 %v534, 4294901760
    %924 = vmatpush1.msra.mxu0 %v923
    %925 = vmatprep.subr.mxu0 0.0
    %v926 = vand.u32 %v535, 4294901760
    %927 = vmatpush1.msra.mxu0 %v926
    %928 = vmatprep.subr.mxu0 0.0
    %v929 = vand.u32 %v536, 4294901760
    %930 = vmatpush1.msra.mxu0 %v929
    %931 = vmatprep.subr.mxu0 0.0
    %v932 = vand.u32 %v537, 4294901760
    %933 = vmatpush1.msra.mxu0 %v932
    %934 = vmatprep.subr.mxu0 0.0
    %v935 = vand.u32 %v538, 4294901760
    %936 = vmatpush1.msra.mxu0 %v935
    %937 = vmatprep.subr.mxu0 0.0
    %938 = vmatpush1.msra.mxu0 0.0
    %939 = vmatprep.subr.mxu0 0.0
    %940 = vmatpush1.msra.mxu0 0.0
    %941 = vmatprep.subr.mxu0 0.0
    %942 = vmatpush1.msra.mxu0 0.0
    %943 = vmatprep.subr.mxu0 0.0
    %944 = vmatpush1.msra.mxu0 0.0
    %945 = vmatprep.subr.mxu0 0.0
    %946 = vmatpush1.msra.mxu0 0.0
    %947 = vmatprep.subr.mxu0 0.0
    %948 = vmatpush1.msra.mxu0 0.0
    %949 = vmatprep.subr.mxu0 0.0
    %950 = vmatpush1.msra.mxu0 0.0
    %951 = vmatprep.subr.mxu0 0.0
    %952 = vmatpush1.msra.mxu0 0.0
    %953 = vmatprep.subr.mxu0 0.0
    %954 = vmatpush1.msra.mxu0 0.0
    %955 = vmatprep.subr.mxu0 0.0
    %956 = vmatpush1.msra.mxu0 0.0
    %957 = vmatprep.subr.mxu0 0.0
    %958 = vmatpush1.msra.mxu0 0.0
    %959 = vmatprep.subr.mxu0 0.0
    %960 = vmatpush1.msra.mxu0 0.0
    %961 = vmatprep.subr.mxu0 0.0
    %962 = vmatpush1.msra.mxu0 0.0
    %963 = vmatprep.subr.mxu0 0.0
    %964 = vmatpush1.msra.mxu0 0.0
    %965 = vmatprep.subr.mxu0 0.0
    %966 = vmatpush1.msra.mxu0 0.0
    %967 = vmatprep.subr.mxu0 0.0
    %968 = vmatpush1.msra.mxu0 0.0
    %969 = vmatprep.mubr.f32.mxu0 0.0
    %v970 = vand.u32 %v522, 4294901760
    %v971 = vsub.f32 %v522, %v970
    %v972 = vand.u32 %v971, 4294901760
    %973 = vmatmul.mubr.f32.gmra.mrb[0].mxu0 %v972
    %v974 = vpop.f32.mrb[0].mxu0
    %v975 = vadd.f32 %v886, %v974
    %v976 = vpop.f32.mrb[0].mxu0
    %977 = vdwg.mxu0
    %978 = vmatprep.subr.mxu0 0.0
    %v979 = vand.u32 %v523, 4294901760
    %v980 = vsub.f32 %v523, %v979
    %v981 = vand.u32 %v980, 4294901760
    %982 = vmatpush1.msra.mxu0 %v981
    %983 = vmatprep.subr.mxu0 0.0
    %v984 = vand.u32 %v524, 4294901760
    %v985 = vsub.f32 %v524, %v984
    %v986 = vand.u32 %v985, 4294901760
    %987 = vmatpush1.msra.mxu0 %v986
    %988 = vmatprep.subr.mxu0 0.0
    %v989 = vand.u32 %v525, 4294901760
    %v990 = vsub.f32 %v525, %v989
    %v991 = vand.u32 %v990, 4294901760
    %992 = vmatpush1.msra.mxu0 %v991
    %993 = vmatprep.subr.mxu0 0.0
    %v994 = vand.u32 %v526, 4294901760
    %v995 = vsub.f32 %v526, %v994
    %v996 = vand.u32 %v995, 4294901760
    %997 = vmatpush1.msra.mxu0 %v996
    %998 = vmatprep.subr.mxu0 0.0
    %v999 = vand.u32 %v527, 4294901760
    %v1000 = vsub.f32 %v527, %v999
    %v1001 = vand.u32 %v1000, 4294901760
    %1002 = vmatpush1.msra.mxu0 %v1001
    %1003 = vmatprep.subr.mxu0 0.0
    %v1004 = vand.u32 %v528, 4294901760
    %v1005 = vsub.f32 %v528, %v1004
    %v1006 = vand.u32 %v1005, 4294901760
    %1007 = vmatpush1.msra.mxu0 %v1006
    %1008 = vmatprep.subr.mxu0 0.0
    %v1009 = vand.u32 %v529, 4294901760
    %v1010 = vsub.f32 %v529, %v1009
    %v1011 = vand.u32 %v1010, 4294901760
    %1012 = vmatpush1.msra.mxu0 %v1011
    %1013 = vmatprep.subr.mxu0 0.0
    %v1014 = vand.u32 %v530, 4294901760
    %v1015 = vsub.f32 %v530, %v1014
    %v1016 = vand.u32 %v1015, 4294901760
    %1017 = vmatpush1.msra.mxu0 %v1016
    %1018 = vmatprep.subr.mxu0 0.0
    %v1019 = vand.u32 %v531, 4294901760
    %v1020 = vsub.f32 %v531, %v1019
    %v1021 = vand.u32 %v1020, 4294901760
    %1022 = vmatpush1.msra.mxu0 %v1021
    %1023 = vmatprep.subr.mxu0 0.0
    %v1024 = vand.u32 %v532, 4294901760
    %v1025 = vsub.f32 %v532, %v1024
    %v1026 = vand.u32 %v1025, 4294901760
    %1027 = vmatpush1.msra.mxu0 %v1026
    %1028 = vmatprep.subr.mxu0 0.0
    %v1029 = vand.u32 %v533, 4294901760
    %v1030 = vsub.f32 %v533, %v1029
    %v1031 = vand.u32 %v1030, 4294901760
    %1032 = vmatpush1.msra.mxu0 %v1031
    %1033 = vmatprep.subr.mxu0 0.0
    %v1034 = vand.u32 %v534, 4294901760
    %v1035 = vsub.f32 %v534, %v1034
    %v1036 = vand.u32 %v1035, 4294901760
    %1037 = vmatpush1.msra.mxu0 %v1036
    %1038 = vmatprep.subr.mxu0 0.0
    %v1039 = vand.u32 %v535, 4294901760
    %v1040 = vsub.f32 %v535, %v1039
    %v1041 = vand.u32 %v1040, 4294901760
    %1042 = vmatpush1.msra.mxu0 %v1041
    %1043 = vmatprep.subr.mxu0 0.0
    %v1044 = vand.u32 %v536, 4294901760
    %v1045 = vsub.f32 %v536, %v1044
    %v1046 = vand.u32 %v1045, 4294901760
    %1047 = vmatpush1.msra.mxu0 %v1046
    %1048 = vmatprep.subr.mxu0 0.0
    %v1049 = vand.u32 %v537, 4294901760
    %v1050 = vsub.f32 %v537, %v1049
    %v1051 = vand.u32 %v1050, 4294901760
    %1052 = vmatpush1.msra.mxu0 %v1051
    %1053 = vmatprep.subr.mxu0 0.0
    %v1054 = vand.u32 %v538, 4294901760
    %v1055 = vsub.f32 %v538, %v1054
    %v1056 = vand.u32 %v1055, 4294901760
    %1057 = vmatpush1.msra.mxu0 %v1056
    %1058 = vmatprep.subr.mxu0 0.0
    %1059 = vmatpush1.msra.mxu0 0.0
    %1060 = vmatprep.subr.mxu0 0.0
    %1061 = vmatpush1.msra.mxu0 0.0
    %1062 = vmatprep.subr.mxu0 0.0
    %1063 = vmatpush1.msra.mxu0 0.0
    %1064 = vmatprep.subr.mxu0 0.0
    %1065 = vmatpush1.msra.mxu0 0.0
    %1066 = vmatprep.subr.mxu0 0.0
    %1067 = vmatpush1.msra.mxu0 0.0
    %1068 = vmatprep.subr.mxu0 0.0
    %1069 = vmatpush1.msra.mxu0 0.0
    %1070 = vmatprep.subr.mxu0 0.0
    %1071 = vmatpush1.msra.mxu0 0.0
    %1072 = vmatprep.subr.mxu0 0.0
    %1073 = vmatpush1.msra.mxu0 0.0
    %1074 = vmatprep.subr.mxu0 0.0
    %1075 = vmatpush1.msra.mxu0 0.0
    %1076 = vmatprep.subr.mxu0 0.0
    %1077 = vmatpush1.msra.mxu0 0.0
    %1078 = vmatprep.subr.mxu0 0.0
    %1079 = vmatpush1.msra.mxu0 0.0
    %1080 = vmatprep.subr.mxu0 0.0
    %1081 = vmatpush1.msra.mxu0 0.0
    %1082 = vmatprep.subr.mxu0 0.0
    %1083 = vmatpush1.msra.mxu0 0.0
    %1084 = vmatprep.subr.mxu0 0.0
    %1085 = vmatpush1.msra.mxu0 0.0
    %1086 = vmatprep.subr.mxu0 0.0
    %1087 = vmatpush1.msra.mxu0 0.0
    %1088 = vmatprep.subr.mxu0 0.0
    %1089 = vmatpush1.msra.mxu0 0.0
    %1090 = vmatprep.mubr.f32.mxu0 0.0
    %v1091 = vand.u32 %v522, 4294901760
    %1092 = vmatmul.mubr.f32.gmra.mrb[0].mxu0 %v1091
    %v1093 = vpop.f32.mrb[0].mxu0
    %v1094 = vadd.f32 %v975, %v1093
    %v1095 = vpop.f32.mrb[0].mxu0
    %1096 = vdwg.mxu0
    %1097 = vmatprep.subr.mxu0 0.0
    %v1098 = vand.u32 %v523, 4294901760
    %1099 = vmatpush1.msra.mxu0 %v1098
    %1100 = vmatprep.subr.mxu0 0.0
    %v1101 = vand.u32 %v524, 4294901760
    %1102 = vmatpush1.msra.mxu0 %v1101
    %1103 = vmatprep.subr.mxu0 0.0
    %v1104 = vand.u32 %v525, 4294901760
    %1105 = vmatpush1.msra.mxu0 %v1104
    %1106 = vmatprep.subr.mxu0 0.0
    %v1107 = vand.u32 %v526, 4294901760
    %1108 = vmatpush1.msra.mxu0 %v1107
    %1109 = vmatprep.subr.mxu0 0.0
    %v1110 = vand.u32 %v527, 4294901760
    %1111 = vmatpush1.msra.mxu0 %v1110
    %1112 = vmatprep.subr.mxu0 0.0
    %v1113 = vand.u32 %v528, 4294901760
    %1114 = vmatpush1.msra.mxu0 %v1113
    %1115 = vmatprep.subr.mxu0 0.0
    %v1116 = vand.u32 %v529, 4294901760
    %1117 = vmatpush1.msra.mxu0 %v1116
    %1118 = vmatprep.subr.mxu0 0.0
    %v1119 = vand.u32 %v530, 4294901760
    %1120 = vmatpush1.msra.mxu0 %v1119
    %1121 = vmatprep.subr.mxu0 0.0
    %v1122 = vand.u32 %v531, 4294901760
    %1123 = vmatpush1.msra.mxu0 %v1122
    %1124 = vmatprep.subr.mxu0 0.0
    %v1125 = vand.u32 %v532, 4294901760
    %1126 = vmatpush1.msra.mxu0 %v1125
    %1127 = vmatprep.subr.mxu0 0.0
    %v1128 = vand.u32 %v533, 4294901760
    %1129 = vmatpush1.msra.mxu0 %v1128
    %1130 = vmatprep.subr.mxu0 0.0
    %v1131 = vand.u32 %v534, 4294901760
    %1132 = vmatpush1.msra.mxu0 %v1131
    %1133 = vmatprep.subr.mxu0 0.0
    %v1134 = vand.u32 %v535, 4294901760
    %1135 = vmatpush1.msra.mxu0 %v1134
    %1136 = vmatprep.subr.mxu0 0.0
    %v1137 = vand.u32 %v536, 4294901760
    %1138 = vmatpush1.msra.mxu0 %v1137
    %1139 = vmatprep.subr.mxu0 0.0
    %v1140 = vand.u32 %v537, 4294901760
    %1141 = vmatpush1.msra.mxu0 %v1140
    %1142 = vmatprep.subr.mxu0 0.0
    %v1143 = vand.u32 %v538, 4294901760
    %1144 = vmatpush1.msra.mxu0 %v1143
    %1145 = vmatprep.subr.mxu0 0.0
    %1146 = vmatpush1.msra.mxu0 0.0
    %1147 = vmatprep.subr.mxu0 0.0
    %1148 = vmatpush1.msra.mxu0 0.0
    %1149 = vmatprep.subr.mxu0 0.0
    %1150 = vmatpush1.msra.mxu0 0.0
    %1151 = vmatprep.subr.mxu0 0.0
    %1152 = vmatpush1.msra.mxu0 0.0
    %1153 = vmatprep.subr.mxu0 0.0
    %1154 = vmatpush1.msra.mxu0 0.0
    %1155 = vmatprep.subr.mxu0 0.0
    %1156 = vmatpush1.msra.mxu0 0.0
    %1157 = vmatprep.subr.mxu0 0.0
    %1158 = vmatpush1.msra.mxu0 0.0
    %1159 = vmatprep.subr.mxu0 0.0
    %1160 = vmatpush1.msra.mxu0 0.0
    %1161 = vmatprep.subr.mxu0 0.0
    %1162 = vmatpush1.msra.mxu0 0.0
    %1163 = vmatprep.subr.mxu0 0.0
    %1164 = vmatpush1.msra.mxu0 0.0
    %1165 = vmatprep.subr.mxu0 0.0
    %1166 = vmatpush1.msra.mxu0 0.0
    %1167 = vmatprep.subr.mxu0 0.0
    %1168 = vmatpush1.msra.mxu0 0.0
    %1169 = vmatprep.subr.mxu0 0.0
    %1170 = vmatpush1.msra.mxu0 0.0
    %1171 = vmatprep.subr.mxu0 0.0
    %1172 = vmatpush1.msra.mxu0 0.0
    %1173 = vmatprep.subr.mxu0 0.0
    %1174 = vmatpush1.msra.mxu0 0.0
    %1175 = vmatprep.subr.mxu0 0.0
    %1176 = vmatpush1.msra.mxu0 0.0
    %1177 = vmatprep.mubr.f32.mxu0 0.0
    %v1178 = vand.u32 %v522, 4294901760
    %1179 = vmatmul.mubr.f32.gmra.mrb[0].mxu0 %v1178
    %v1180 = vpop.f32.mrb[0].mxu0
    %v1181 = vadd.f32 %v1094, %v1180
    %v1182 = vpop.f32.mrb[0].mxu0
    %1183 = vdwg.mxu0
    %v1184 = vmax.f32 %v1181, 0.0
    %v1185 = vld [vmem:[#allocation5] sm:$0xff]
    %v1186 = vld [vmem:[#allocation5 + $0x8] sm:$0xff]
    %v1187 = vld [vmem:[#allocation5 + $0x10] sm:$0xff]
    %v1188 = vld [vmem:[#allocation5 + $0x18] sm:$0xff]
    %v1189 = vld [vmem:[#allocation5 + $0x20] sm:$0xff]
    %v1190 = vld [vmem:[#allocation5 + $0x28] sm:$0xff]
    %v1191 = vld [vmem:[#allocation5 + $0x30] sm:$0xff]
    %v1192 = vld [vmem:[#allocation5 + $0x38] sm:$0xff]
    %v1193 = vld [vmem:[#allocation5 + $0x40] sm:$0xff]
    %v1194 = vld [vmem:[#allocation5 + $0x48] sm:$0xff]
    %v1195 = vld [vmem:[#allocation5 + $0x50] sm:$0xff]
    %v1196 = vld [vmem:[#allocation5 + $0x58] sm:$0xff]
    %v1197 = vld [vmem:[#allocation5 + $0x60] sm:$0xff]
    %v1198 = vld [vmem:[#allocation5 + $0x68] sm:$0xff]
    %v1199 = vld [vmem:[#allocation5 + $0x70] sm:$0xff]
    %v1200 = vld [vmem:[#allocation5 + $0x78] sm:$0xff]
    %v1201 = vlaneseq
    %v1202 = vshrl.u32 %v1201, 7
    %v1203 = vsub.s32 2, %v1202
    %v1204 = vrot.slane %v65, %v1203
    %1205 = vmatprep.subr.mxu0 0.0
    %v1206 = vand.u32 %v1185, 4294901760
    %1207 = vmatpush1.msra.mxu0 %v1206
    %1208 = vmatprep.subr.mxu0 0.0
    %v1209 = vand.u32 %v1186, 4294901760
    %1210 = vmatpush1.msra.mxu0 %v1209
    %1211 = vmatprep.subr.mxu0 0.0
    %v1212 = vand.u32 %v1187, 4294901760
    %1213 = vmatpush1.msra.mxu0 %v1212
    %1214 = vmatprep.subr.mxu0 0.0
    %v1215 = vand.u32 %v1188, 4294901760
    %1216 = vmatpush1.msra.mxu0 %v1215
    %1217 = vmatprep.subr.mxu0 0.0
    %v1218 = vand.u32 %v1189, 4294901760
    %1219 = vmatpush1.msra.mxu0 %v1218
    %1220 = vmatprep.subr.mxu0 0.0
    %v1221 = vand.u32 %v1190, 4294901760
    %1222 = vmatpush1.msra.mxu0 %v1221
    %1223 = vmatprep.subr.mxu0 0.0
    %v1224 = vand.u32 %v1191, 4294901760
    %1225 = vmatpush1.msra.mxu0 %v1224
    %1226 = vmatprep.subr.mxu0 0.0
    %v1227 = vand.u32 %v1192, 4294901760
    %1228 = vmatpush1.msra.mxu0 %v1227
    %1229 = vmatprep.subr.mxu0 0.0
    %v1230 = vand.u32 %v1193, 4294901760
    %1231 = vmatpush1.msra.mxu0 %v1230
    %1232 = vmatprep.subr.mxu0 0.0
    %v1233 = vand.u32 %v1194, 4294901760
    %1234 = vmatpush1.msra.mxu0 %v1233
    %1235 = vmatprep.subr.mxu0 0.0
    %v1236 = vand.u32 %v1195, 4294901760
    %1237 = vmatpush1.msra.mxu0 %v1236
    %1238 = vmatprep.subr.mxu0 0.0
    %v1239 = vand.u32 %v1196, 4294901760
    %1240 = vmatpush1.msra.mxu0 %v1239
    %1241 = vmatprep.subr.mxu0 0.0
    %v1242 = vand.u32 %v1197, 4294901760
    %1243 = vmatpush1.msra.mxu0 %v1242
    %1244 = vmatprep.subr.mxu0 0.0
    %v1245 = vand.u32 %v1198, 4294901760
    %1246 = vmatpush1.msra.mxu0 %v1245
    %1247 = vmatprep.subr.mxu0 0.0
    %v1248 = vand.u32 %v1199, 4294901760
    %1249 = vmatpush1.msra.mxu0 %v1248
    %1250 = vmatprep.subr.mxu0 0.0
    %v1251 = vand.u32 %v1200, 4294901760
    %1252 = vmatpush1.msra.mxu0 %v1251
    %1253 = vmatprep.subr.mxu0 0.0
    %1254 = vmatpush1.msra.mxu0 0.0
    %1255 = vmatprep.subr.mxu0 0.0
    %1256 = vmatpush1.msra.mxu0 0.0
    %1257 = vmatprep.subr.mxu0 0.0
    %1258 = vmatpush1.msra.mxu0 0.0
    %1259 = vmatprep.subr.mxu0 0.0
    %1260 = vmatpush1.msra.mxu0 0.0
    %1261 = vmatprep.subr.mxu0 0.0
    %1262 = vmatpush1.msra.mxu0 0.0
    %1263 = vmatprep.subr.mxu0 0.0
    %1264 = vmatpush1.msra.mxu0 0.0
    %1265 = vmatprep.subr.mxu0 0.0
    %1266 = vmatpush1.msra.mxu0 0.0
    %1267 = vmatprep.subr.mxu0 0.0
    %1268 = vmatpush1.msra.mxu0 0.0
    %1269 = vmatprep.subr.mxu0 0.0
    %1270 = vmatpush1.msra.mxu0 0.0
    %1271 = vmatprep.subr.mxu0 0.0
    %1272 = vmatpush1.msra.mxu0 0.0
    %1273 = vmatprep.subr.mxu0 0.0
    %1274 = vmatpush1.msra.mxu0 0.0
    %1275 = vmatprep.subr.mxu0 0.0
    %1276 = vmatpush1.msra.mxu0 0.0
    %1277 = vmatprep.subr.mxu0 0.0
    %1278 = vmatpush1.msra.mxu0 0.0
    %1279 = vmatprep.subr.mxu0 0.0
    %1280 = vmatpush1.msra.mxu0 0.0
    %1281 = vmatprep.subr.mxu0 0.0
    %1282 = vmatpush1.msra.mxu0 0.0
    %1283 = vmatprep.subr.mxu0 0.0
    %1284 = vmatpush1.msra.mxu0 0.0
    %1285 = vmatprep.mubr.f32.mxu0 0.0
    %v1286 = vand.u32 %v1184, 4294901760
    %v1287 = vsub.f32 %v1184, %v1286
    %v1288 = vand.u32 %v1287, 4294901760
    %v1289 = vsub.f32 %v1287, %v1288
    %v1290 = vand.u32 %v1289, 4294901760
    %1291 = vmatmul.mubr.f32.gmra.mrb[0].mxu0 %v1290
    %v1292 = vpop.f32.mrb[0].mxu0
    %v1293 = vadd.f32 %v1204, %v1292
    %v1294 = vpop.f32.mrb[0].mxu0
    %1295 = vdwg.mxu0
    %1296 = vmatprep.subr.mxu0 0.0
    %v1297 = vand.u32 %v1185, 4294901760
    %v1298 = vsub.f32 %v1185, %v1297
    %v1299 = vand.u32 %v1298, 4294901760
    %v1300 = vsub.f32 %v1298, %v1299
    %v1301 = vand.u32 %v1300, 4294901760
    %1302 = vmatpush1.msra.mxu0 %v1301
    %1303 = vmatprep.subr.mxu0 0.0
    %v1304 = vand.u32 %v1186, 4294901760
    %v1305 = vsub.f32 %v1186, %v1304
    %v1306 = vand.u32 %v1305, 4294901760
    %v1307 = vsub.f32 %v1305, %v1306
    %v1308 = vand.u32 %v1307, 4294901760
    %1309 = vmatpush1.msra.mxu0 %v1308
    %1310 = vmatprep.subr.mxu0 0.0
    %v1311 = vand.u32 %v1187, 4294901760
    %v1312 = vsub.f32 %v1187, %v1311
    %v1313 = vand.u32 %v1312, 4294901760
    %v1314 = vsub.f32 %v1312, %v1313
    %v1315 = vand.u32 %v1314, 4294901760
    %1316 = vmatpush1.msra.mxu0 %v1315
    %1317 = vmatprep.subr.mxu0 0.0
    %v1318 = vand.u32 %v1188, 4294901760
    %v1319 = vsub.f32 %v1188, %v1318
    %v1320 = vand.u32 %v1319, 4294901760
    %v1321 = vsub.f32 %v1319, %v1320
    %v1322 = vand.u32 %v1321, 4294901760
    %1323 = vmatpush1.msra.mxu0 %v1322
    %1324 = vmatprep.subr.mxu0 0.0
    %v1325 = vand.u32 %v1189, 4294901760
    %v1326 = vsub.f32 %v1189, %v1325
    %v1327 = vand.u32 %v1326, 4294901760
    %v1328 = vsub.f32 %v1326, %v1327
    %v1329 = vand.u32 %v1328, 4294901760
    %1330 = vmatpush1.msra.mxu0 %v1329
    %1331 = vmatprep.subr.mxu0 0.0
    %v1332 = vand.u32 %v1190, 4294901760
    %v1333 = vsub.f32 %v1190, %v1332
    %v1334 = vand.u32 %v1333, 4294901760
    %v1335 = vsub.f32 %v1333, %v1334
    %v1336 = vand.u32 %v1335, 4294901760
    %1337 = vmatpush1.msra.mxu0 %v1336
    %1338 = vmatprep.subr.mxu0 0.0
    %v1339 = vand.u32 %v1191, 4294901760
    %v1340 = vsub.f32 %v1191, %v1339
    %v1341 = vand.u32 %v1340, 4294901760
    %v1342 = vsub.f32 %v1340, %v1341
    %v1343 = vand.u32 %v1342, 4294901760
    %1344 = vmatpush1.msra.mxu0 %v1343
    %1345 = vmatprep.subr.mxu0 0.0
    %v1346 = vand.u32 %v1192, 4294901760
    %v1347 = vsub.f32 %v1192, %v1346
    %v1348 = vand.u32 %v1347, 4294901760
    %v1349 = vsub.f32 %v1347, %v1348
    %v1350 = vand.u32 %v1349, 4294901760
    %1351 = vmatpush1.msra.mxu0 %v1350
    %1352 = vmatprep.subr.mxu0 0.0
    %v1353 = vand.u32 %v1193, 4294901760
    %v1354 = vsub.f32 %v1193, %v1353
    %v1355 = vand.u32 %v1354, 4294901760
    %v1356 = vsub.f32 %v1354, %v1355
    %v1357 = vand.u32 %v1356, 4294901760
    %1358 = vmatpush1.msra.mxu0 %v1357
    %1359 = vmatprep.subr.mxu0 0.0
    %v1360 = vand.u32 %v1194, 4294901760
    %v1361 = vsub.f32 %v1194, %v1360
    %v1362 = vand.u32 %v1361, 4294901760
    %v1363 = vsub.f32 %v1361, %v1362
    %v1364 = vand.u32 %v1363, 4294901760
    %1365 = vmatpush1.msra.mxu0 %v1364
    %1366 = vmatprep.subr.mxu0 0.0
    %v1367 = vand.u32 %v1195, 4294901760
    %v1368 = vsub.f32 %v1195, %v1367
    %v1369 = vand.u32 %v1368, 4294901760
    %v1370 = vsub.f32 %v1368, %v1369
    %v1371 = vand.u32 %v1370, 4294901760
    %1372 = vmatpush1.msra.mxu0 %v1371
    %1373 = vmatprep.subr.mxu0 0.0
    %v1374 = vand.u32 %v1196, 4294901760
    %v1375 = vsub.f32 %v1196, %v1374
    %v1376 = vand.u32 %v1375, 4294901760
    %v1377 = vsub.f32 %v1375, %v1376
    %v1378 = vand.u32 %v1377, 4294901760
    %1379 = vmatpush1.msra.mxu0 %v1378
    %1380 = vmatprep.subr.mxu0 0.0
    %v1381 = vand.u32 %v1197, 4294901760
    %v1382 = vsub.f32 %v1197, %v1381
    %v1383 = vand.u32 %v1382, 4294901760
    %v1384 = vsub.f32 %v1382, %v1383
    %v1385 = vand.u32 %v1384, 4294901760
    %1386 = vmatpush1.msra.mxu0 %v1385
    %1387 = vmatprep.subr.mxu0 0.0
    %v1388 = vand.u32 %v1198, 4294901760
    %v1389 = vsub.f32 %v1198, %v1388
    %v1390 = vand.u32 %v1389, 4294901760
    %v1391 = vsub.f32 %v1389, %v1390
    %v1392 = vand.u32 %v1391, 4294901760
    %1393 = vmatpush1.msra.mxu0 %v1392
    %1394 = vmatprep.subr.mxu0 0.0
    %v1395 = vand.u32 %v1199, 4294901760
    %v1396 = vsub.f32 %v1199, %v1395
    %v1397 = vand.u32 %v1396, 4294901760
    %v1398 = vsub.f32 %v1396, %v1397
    %v1399 = vand.u32 %v1398, 4294901760
    %1400 = vmatpush1.msra.mxu0 %v1399
    %1401 = vmatprep.subr.mxu0 0.0
    %v1402 = vand.u32 %v1200, 4294901760
    %v1403 = vsub.f32 %v1200, %v1402
    %v1404 = vand.u32 %v1403, 4294901760
    %v1405 = vsub.f32 %v1403, %v1404
    %v1406 = vand.u32 %v1405, 4294901760
    %1407 = vmatpush1.msra.mxu0 %v1406
    %1408 = vmatprep.subr.mxu0 0.0
    %1409 = vmatpush1.msra.mxu0 0.0
    %1410 = vmatprep.subr.mxu0 0.0
    %1411 = vmatpush1.msra.mxu0 0.0
    %1412 = vmatprep.subr.mxu0 0.0
    %1413 = vmatpush1.msra.mxu0 0.0
    %1414 = vmatprep.subr.mxu0 0.0
    %1415 = vmatpush1.msra.mxu0 0.0
    %1416 = vmatprep.subr.mxu0 0.0
    %1417 = vmatpush1.msra.mxu0 0.0
    %1418 = vmatprep.subr.mxu0 0.0
    %1419 = vmatpush1.msra.mxu0 0.0
    %1420 = vmatprep.subr.mxu0 0.0
    %1421 = vmatpush1.msra.mxu0 0.0
    %1422 = vmatprep.subr.mxu0 0.0
    %1423 = vmatpush1.msra.mxu0 0.0
    %1424 = vmatprep.subr.mxu0 0.0
    %1425 = vmatpush1.msra.mxu0 0.0
    %1426 = vmatprep.subr.mxu0 0.0
    %1427 = vmatpush1.msra.mxu0 0.0
    %1428 = vmatprep.subr.mxu0 0.0
    %1429 = vmatpush1.msra.mxu0 0.0
    %1430 = vmatprep.subr.mxu0 0.0
    %1431 = vmatpush1.msra.mxu0 0.0
    %1432 = vmatprep.subr.mxu0 0.0
    %1433 = vmatpush1.msra.mxu0 0.0
    %1434 = vmatprep.subr.mxu0 0.0
    %1435 = vmatpush1.msra.mxu0 0.0
    %1436 = vmatprep.subr.mxu0 0.0
    %1437 = vmatpush1.msra.mxu0 0.0
    %1438 = vmatprep.subr.mxu0 0.0
    %1439 = vmatpush1.msra.mxu0 0.0
    %1440 = vmatprep.mubr.f32.mxu0 0.0
    %v1441 = vand.u32 %v1184, 4294901760
    %1442 = vmatmul.mubr.f32.gmra.mrb[0].mxu0 %v1441
    %v1443 = vpop.f32.mrb[0].mxu0
    %v1444 = vadd.f32 %v1293, %v1443
    %v1445 = vpop.f32.mrb[0].mxu0
    %1446 = vdwg.mxu0
    %1447 = vmatprep.subr.mxu0 0.0
    %v1448 = vand.u32 %v1185, 4294901760
    %v1449 = vsub.f32 %v1185, %v1448
    %1450 = vmatpush1.msra.mxu0 %v1449
    %1451 = vmatprep.subr.mxu0 0.0
    %v1452 = vand.u32 %v1186, 4294901760
    %v1453 = vsub.f32 %v1186, %v1452
    %1454 = vmatpush1.msra.mxu0 %v1453
    %1455 = vmatprep.subr.mxu0 0.0
    %v1456 = vand.u32 %v1187, 4294901760
    %v1457 = vsub.f32 %v1187, %v1456
    %1458 = vmatpush1.msra.mxu0 %v1457
    %1459 = vmatprep.subr.mxu0 0.0
    %v1460 = vand.u32 %v1188, 4294901760
    %v1461 = vsub.f32 %v1188, %v1460
    %1462 = vmatpush1.msra.mxu0 %v1461
    %1463 = vmatprep.subr.mxu0 0.0
    %v1464 = vand.u32 %v1189, 4294901760
    %v1465 = vsub.f32 %v1189, %v1464
    %1466 = vmatpush1.msra.mxu0 %v1465
    %1467 = vmatprep.subr.mxu0 0.0
    %v1468 = vand.u32 %v1190, 4294901760
    %v1469 = vsub.f32 %v1190, %v1468
    %1470 = vmatpush1.msra.mxu0 %v1469
    %1471 = vmatprep.subr.mxu0 0.0
    %v1472 = vand.u32 %v1191, 4294901760
    %v1473 = vsub.f32 %v1191, %v1472
    %1474 = vmatpush1.msra.mxu0 %v1473
    %1475 = vmatprep.subr.mxu0 0.0
    %v1476 = vand.u32 %v1192, 4294901760
    %v1477 = vsub.f32 %v1192, %v1476
    %1478 = vmatpush1.msra.mxu0 %v1477
    %1479 = vmatprep.subr.mxu0 0.0
    %v1480 = vand.u32 %v1193, 4294901760
    %v1481 = vsub.f32 %v1193, %v1480
    %1482 = vmatpush1.msra.mxu0 %v1481
    %1483 = vmatprep.subr.mxu0 0.0
    %v1484 = vand.u32 %v1194, 4294901760
    %v1485 = vsub.f32 %v1194, %v1484
    %1486 = vmatpush1.msra.mxu0 %v1485
    %1487 = vmatprep.subr.mxu0 0.0
    %v1488 = vand.u32 %v1195, 4294901760
    %v1489 = vsub.f32 %v1195, %v1488
    %1490 = vmatpush1.msra.mxu0 %v1489
    %1491 = vmatprep.subr.mxu0 0.0
    %v1492 = vand.u32 %v1196, 4294901760
    %v1493 = vsub.f32 %v1196, %v1492
    %1494 = vmatpush1.msra.mxu0 %v1493
    %1495 = vmatprep.subr.mxu0 0.0
    %v1496 = vand.u32 %v1197, 4294901760
    %v1497 = vsub.f32 %v1197, %v1496
    %1498 = vmatpush1.msra.mxu0 %v1497
    %1499 = vmatprep.subr.mxu0 0.0
    %v1500 = vand.u32 %v1198, 4294901760
    %v1501 = vsub.f32 %v1198, %v1500
    %1502 = vmatpush1.msra.mxu0 %v1501
    %1503 = vmatprep.subr.mxu0 0.0
    %v1504 = vand.u32 %v1199, 4294901760
    %v1505 = vsub.f32 %v1199, %v1504
    %1506 = vmatpush1.msra.mxu0 %v1505
    %1507 = vmatprep.subr.mxu0 0.0
    %v1508 = vand.u32 %v1200, 4294901760
    %v1509 = vsub.f32 %v1200, %v1508
    %1510 = vmatpush1.msra.mxu0 %v1509
    %1511 = vmatprep.subr.mxu0 0.0
    %1512 = vmatpush1.msra.mxu0 0.0
    %1513 = vmatprep.subr.mxu0 0.0
    %1514 = vmatpush1.msra.mxu0 0.0
    %1515 = vmatprep.subr.mxu0 0.0
    %1516 = vmatpush1.msra.mxu0 0.0
    %1517 = vmatprep.subr.mxu0 0.0
    %1518 = vmatpush1.msra.mxu0 0.0
    %1519 = vmatprep.subr.mxu0 0.0
    %1520 = vmatpush1.msra.mxu0 0.0
    %1521 = vmatprep.subr.mxu0 0.0
    %1522 = vmatpush1.msra.mxu0 0.0
    %1523 = vmatprep.subr.mxu0 0.0
    %1524 = vmatpush1.msra.mxu0 0.0
    %1525 = vmatprep.subr.mxu0 0.0
    %1526 = vmatpush1.msra.mxu0 0.0
    %1527 = vmatprep.subr.mxu0 0.0
    %1528 = vmatpush1.msra.mxu0 0.0
    %1529 = vmatprep.subr.mxu0 0.0
    %1530 = vmatpush1.msra.mxu0 0.0
    %1531 = vmatprep.subr.mxu0 0.0
    %1532 = vmatpush1.msra.mxu0 0.0
    %1533 = vmatprep.subr.mxu0 0.0
    %1534 = vmatpush1.msra.mxu0 0.0
    %1535 = vmatprep.subr.mxu0 0.0
    %1536 = vmatpush1.msra.mxu0 0.0
    %1537 = vmatprep.subr.mxu0 0.0
    %1538 = vmatpush1.msra.mxu0 0.0
    %1539 = vmatprep.subr.mxu0 0.0
    %1540 = vmatpush1.msra.mxu0 0.0
    %1541 = vmatprep.subr.mxu0 0.0
    %1542 = vmatpush1.msra.mxu0 0.0
    %1543 = vmatprep.mubr.f32.mxu0 0.0
    %v1544 = vand.u32 %v1184, 4294901760
    %v1545 = vsub.f32 %v1184, %v1544
    %1546 = vmatmul.mubr.f32.gmra.mrb[0].mxu0 %v1545
    %v1547 = vpop.f32.mrb[0].mxu0
    %v1548 = vadd.f32 %v1444, %v1547
    %v1549 = vpop.f32.mrb[0].mxu0
    %1550 = vdwg.mxu0
    %1551 = vmatprep.subr.mxu0 0.0
    %v1552 = vand.u32 %v1185, 4294901760
    %1553 = vmatpush1.msra.mxu0 %v1552
    %1554 = vmatprep.subr.mxu0 0.0
    %v1555 = vand.u32 %v1186, 4294901760
    %1556 = vmatpush1.msra.mxu0 %v1555
    %1557 = vmatprep.subr.mxu0 0.0
    %v1558 = vand.u32 %v1187, 4294901760
    %1559 = vmatpush1.msra.mxu0 %v1558
    %1560 = vmatprep.subr.mxu0 0.0
    %v1561 = vand.u32 %v1188, 4294901760
    %1562 = vmatpush1.msra.mxu0 %v1561
    %1563 = vmatprep.subr.mxu0 0.0
    %v1564 = vand.u32 %v1189, 4294901760
    %1565 = vmatpush1.msra.mxu0 %v1564
    %1566 = vmatprep.subr.mxu0 0.0
    %v1567 = vand.u32 %v1190, 4294901760
    %1568 = vmatpush1.msra.mxu0 %v1567
    %1569 = vmatprep.subr.mxu0 0.0
    %v1570 = vand.u32 %v1191, 4294901760
    %1571 = vmatpush1.msra.mxu0 %v1570
    %1572 = vmatprep.subr.mxu0 0.0
    %v1573 = vand.u32 %v1192, 4294901760
    %1574 = vmatpush1.msra.mxu0 %v1573
    %1575 = vmatprep.subr.mxu0 0.0
    %v1576 = vand.u32 %v1193, 4294901760
    %1577 = vmatpush1.msra.mxu0 %v1576
    %1578 = vmatprep.subr.mxu0 0.0
    %v1579 = vand.u32 %v1194, 4294901760
    %1580 = vmatpush1.msra.mxu0 %v1579
    %1581 = vmatprep.subr.mxu0 0.0
    %v1582 = vand.u32 %v1195, 4294901760
    %1583 = vmatpush1.msra.mxu0 %v1582
    %1584 = vmatprep.subr.mxu0 0.0
    %v1585 = vand.u32 %v1196, 4294901760
    %1586 = vmatpush1.msra.mxu0 %v1585
    %1587 = vmatprep.subr.mxu0 0.0
    %v1588 = vand.u32 %v1197, 4294901760
    %1589 = vmatpush1.msra.mxu0 %v1588
    %1590 = vmatprep.subr.mxu0 0.0
    %v1591 = vand.u32 %v1198, 4294901760
    %1592 = vmatpush1.msra.mxu0 %v1591
    %1593 = vmatprep.subr.mxu0 0.0
    %v1594 = vand.u32 %v1199, 4294901760
    %1595 = vmatpush1.msra.mxu0 %v1594
    %1596 = vmatprep.subr.mxu0 0.0
    %v1597 = vand.u32 %v1200, 4294901760
    %1598 = vmatpush1.msra.mxu0 %v1597
    %1599 = vmatprep.subr.mxu0 0.0
    %1600 = vmatpush1.msra.mxu0 0.0
    %1601 = vmatprep.subr.mxu0 0.0
    %1602 = vmatpush1.msra.mxu0 0.0
    %1603 = vmatprep.subr.mxu0 0.0
    %1604 = vmatpush1.msra.mxu0 0.0
    %1605 = vmatprep.subr.mxu0 0.0
    %1606 = vmatpush1.msra.mxu0 0.0
    %1607 = vmatprep.subr.mxu0 0.0
    %1608 = vmatpush1.msra.mxu0 0.0
    %1609 = vmatprep.subr.mxu0 0.0
    %1610 = vmatpush1.msra.mxu0 0.0
    %1611 = vmatprep.subr.mxu0 0.0
    %1612 = vmatpush1.msra.mxu0 0.0
    %1613 = vmatprep.subr.mxu0 0.0
    %1614 = vmatpush1.msra.mxu0 0.0
    %1615 = vmatprep.subr.mxu0 0.0
    %1616 = vmatpush1.msra.mxu0 0.0
    %1617 = vmatprep.subr.mxu0 0.0
    %1618 = vmatpush1.msra.mxu0 0.0
    %1619 = vmatprep.subr.mxu0 0.0
    %1620 = vmatpush1.msra.mxu0 0.0
    %1621 = vmatprep.subr.mxu0 0.0
    %1622 = vmatpush1.msra.mxu0 0.0
    %1623 = vmatprep.subr.mxu0 0.0
    %1624 = vmatpush1.msra.mxu0 0.0
    %1625 = vmatprep.subr.mxu0 0.0
    %1626 = vmatpush1.msra.mxu0 0.0
    %1627 = vmatprep.subr.mxu0 0.0
    %1628 = vmatpush1.msra.mxu0 0.0
    %1629 = vmatprep.subr.mxu0 0.0
    %1630 = vmatpush1.msra.mxu0 0.0
    %1631 = vmatprep.mubr.f32.mxu0 0.0
    %v1632 = vand.u32 %v1184, 4294901760
    %v1633 = vsub.f32 %v1184, %v1632
    %v1634 = vand.u32 %v1633, 4294901760
    %1635 = vmatmul.mubr.f32.gmra.mrb[0].mxu0 %v1634
    %v1636 = vpop.f32.mrb[0].mxu0
    %v1637 = vadd.f32 %v1548, %v1636
    %v1638 = vpop.f32.mrb[0].mxu0
    %1639 = vdwg.mxu0
    %1640 = vmatprep.subr.mxu0 0.0
    %v1641 = vand.u32 %v1185, 4294901760
    %v1642 = vsub.f32 %v1185, %v1641
    %v1643 = vand.u32 %v1642, 4294901760
    %1644 = vmatpush1.msra.mxu0 %v1643
    %1645 = vmatprep.subr.mxu0 0.0
    %v1646 = vand.u32 %v1186, 4294901760
    %v1647 = vsub.f32 %v1186, %v1646
    %v1648 = vand.u32 %v1647, 4294901760
    %1649 = vmatpush1.msra.mxu0 %v1648
    %1650 = vmatprep.subr.mxu0 0.0
    %v1651 = vand.u32 %v1187, 4294901760
    %v1652 = vsub.f32 %v1187, %v1651
    %v1653 = vand.u32 %v1652, 4294901760
    %1654 = vmatpush1.msra.mxu0 %v1653
    %1655 = vmatprep.subr.mxu0 0.0
    %v1656 = vand.u32 %v1188, 4294901760
    %v1657 = vsub.f32 %v1188, %v1656
    %v1658 = vand.u32 %v1657, 4294901760
    %1659 = vmatpush1.msra.mxu0 %v1658
    %1660 = vmatprep.subr.mxu0 0.0
    %v1661 = vand.u32 %v1189, 4294901760
    %v1662 = vsub.f32 %v1189, %v1661
    %v1663 = vand.u32 %v1662, 4294901760
    %1664 = vmatpush1.msra.mxu0 %v1663
    %1665 = vmatprep.subr.mxu0 0.0
    %v1666 = vand.u32 %v1190, 4294901760
    %v1667 = vsub.f32 %v1190, %v1666
    %v1668 = vand.u32 %v1667, 4294901760
    %1669 = vmatpush1.msra.mxu0 %v1668
    %1670 = vmatprep.subr.mxu0 0.0
    %v1671 = vand.u32 %v1191, 4294901760
    %v1672 = vsub.f32 %v1191, %v1671
    %v1673 = vand.u32 %v1672, 4294901760
    %1674 = vmatpush1.msra.mxu0 %v1673
    %1675 = vmatprep.subr.mxu0 0.0
    %v1676 = vand.u32 %v1192, 4294901760
    %v1677 = vsub.f32 %v1192, %v1676
    %v1678 = vand.u32 %v1677, 4294901760
    %1679 = vmatpush1.msra.mxu0 %v1678
    %1680 = vmatprep.subr.mxu0 0.0
    %v1681 = vand.u32 %v1193, 4294901760
    %v1682 = vsub.f32 %v1193, %v1681
    %v1683 = vand.u32 %v1682, 4294901760
    %1684 = vmatpush1.msra.mxu0 %v1683
    %1685 = vmatprep.subr.mxu0 0.0
    %v1686 = vand.u32 %v1194, 4294901760
    %v1687 = vsub.f32 %v1194, %v1686
    %v1688 = vand.u32 %v1687, 4294901760
    %1689 = vmatpush1.msra.mxu0 %v1688
    %1690 = vmatprep.subr.mxu0 0.0
    %v1691 = vand.u32 %v1195, 4294901760
    %v1692 = vsub.f32 %v1195, %v1691
    %v1693 = vand.u32 %v1692, 4294901760
    %1694 = vmatpush1.msra.mxu0 %v1693
    %1695 = vmatprep.subr.mxu0 0.0
    %v1696 = vand.u32 %v1196, 4294901760
    %v1697 = vsub.f32 %v1196, %v1696
    %v1698 = vand.u32 %v1697, 4294901760
    %1699 = vmatpush1.msra.mxu0 %v1698
    %1700 = vmatprep.subr.mxu0 0.0
    %v1701 = vand.u32 %v1197, 4294901760
    %v1702 = vsub.f32 %v1197, %v1701
    %v1703 = vand.u32 %v1702, 4294901760
    %1704 = vmatpush1.msra.mxu0 %v1703
    %1705 = vmatprep.subr.mxu0 0.0
    %v1706 = vand.u32 %v1198, 4294901760
    %v1707 = vsub.f32 %v1198, %v1706
    %v1708 = vand.u32 %v1707, 4294901760
    %1709 = vmatpush1.msra.mxu0 %v1708
    %1710 = vmatprep.subr.mxu0 0.0
    %v1711 = vand.u32 %v1199, 4294901760
    %v1712 = vsub.f32 %v1199, %v1711
    %v1713 = vand.u32 %v1712, 4294901760
    %1714 = vmatpush1.msra.mxu0 %v1713
    %1715 = vmatprep.subr.mxu0 0.0
    %v1716 = vand.u32 %v1200, 4294901760
    %v1717 = vsub.f32 %v1200, %v1716
    %v1718 = vand.u32 %v1717, 4294901760
    %1719 = vmatpush1.msra.mxu0 %v1718
    %1720 = vmatprep.subr.mxu0 0.0
    %1721 = vmatpush1.msra.mxu0 0.0
    %1722 = vmatprep.subr.mxu0 0.0
    %1723 = vmatpush1.msra.mxu0 0.0
    %1724 = vmatprep.subr.mxu0 0.0
    %1725 = vmatpush1.msra.mxu0 0.0
    %1726 = vmatprep.subr.mxu0 0.0
    %1727 = vmatpush1.msra.mxu0 0.0
    %1728 = vmatprep.subr.mxu0 0.0
    %1729 = vmatpush1.msra.mxu0 0.0
    %1730 = vmatprep.subr.mxu0 0.0
    %1731 = vmatpush1.msra.mxu0 0.0
    %1732 = vmatprep.subr.mxu0 0.0
    %1733 = vmatpush1.msra.mxu0 0.0
    %1734 = vmatprep.subr.mxu0 0.0
    %1735 = vmatpush1.msra.mxu0 0.0
    %1736 = vmatprep.subr.mxu0 0.0
    %1737 = vmatpush1.msra.mxu0 0.0
    %1738 = vmatprep.subr.mxu0 0.0
    %1739 = vmatpush1.msra.mxu0 0.0
    %1740 = vmatprep.subr.mxu0 0.0
    %1741 = vmatpush1.msra.mxu0 0.0
    %1742 = vmatprep.subr.mxu0 0.0
    %1743 = vmatpush1.msra.mxu0 0.0
    %1744 = vmatprep.subr.mxu0 0.0
    %1745 = vmatpush1.msra.mxu0 0.0
    %1746 = vmatprep.subr.mxu0 0.0
    %1747 = vmatpush1.msra.mxu0 0.0
    %1748 = vmatprep.subr.mxu0 0.0
    %1749 = vmatpush1.msra.mxu0 0.0
    %1750 = vmatprep.subr.mxu0 0.0
    %1751 = vmatpush1.msra.mxu0 0.0
    %1752 = vmatprep.mubr.f32.mxu0 0.0
    %v1753 = vand.u32 %v1184, 4294901760
    %1754 = vmatmul.mubr.f32.gmra.mrb[0].mxu0 %v1753
    %v1755 = vpop.f32.mrb[0].mxu0
    %v1756 = vadd.f32 %v1637, %v1755
    %v1757 = vpop.f32.mrb[0].mxu0
    %1758 = vdwg.mxu0
    %1759 = vmatprep.subr.mxu0 0.0
    %v1760 = vand.u32 %v1185, 4294901760
    %1761 = vmatpush1.msra.mxu0 %v1760
    %1762 = vmatprep.subr.mxu0 0.0
    %v1763 = vand.u32 %v1186, 4294901760
    %1764 = vmatpush1.msra.mxu0 %v1763
    %1765 = vmatprep.subr.mxu0 0.0
    %v1766 = vand.u32 %v1187, 4294901760
    %1767 = vmatpush1.msra.mxu0 %v1766
    %1768 = vmatprep.subr.mxu0 0.0
    %v1769 = vand.u32 %v1188, 4294901760
    %1770 = vmatpush1.msra.mxu0 %v1769
    %1771 = vmatprep.subr.mxu0 0.0
    %v1772 = vand.u32 %v1189, 4294901760
    %1773 = vmatpush1.msra.mxu0 %v1772
    %1774 = vmatprep.subr.mxu0 0.0
    %v1775 = vand.u32 %v1190, 4294901760
    %1776 = vmatpush1.msra.mxu0 %v1775
    %1777 = vmatprep.subr.mxu0 0.0
    %v1778 = vand.u32 %v1191, 4294901760
    %1779 = vmatpush1.msra.mxu0 %v1778
    %1780 = vmatprep.subr.mxu0 0.0
    %v1781 = vand.u32 %v1192, 4294901760
    %1782 = vmatpush1.msra.mxu0 %v1781
    %1783 = vmatprep.subr.mxu0 0.0
    %v1784 = vand.u32 %v1193, 4294901760
    %1785 = vmatpush1.msra.mxu0 %v1784
    %1786 = vmatprep.subr.mxu0 0.0
    %v1787 = vand.u32 %v1194, 4294901760
    %1788 = vmatpush1.msra.mxu0 %v1787
    %1789 = vmatprep.subr.mxu0 0.0
    %v1790 = vand.u32 %v1195, 4294901760
    %1791 = vmatpush1.msra.mxu0 %v1790
    %1792 = vmatprep.subr.mxu0 0.0
    %v1793 = vand.u32 %v1196, 4294901760
    %1794 = vmatpush1.msra.mxu0 %v1793
    %1795 = vmatprep.subr.mxu0 0.0
    %v1796 = vand.u32 %v1197, 4294901760
    %1797 = vmatpush1.msra.mxu0 %v1796
    %1798 = vmatprep.subr.mxu0 0.0
    %v1799 = vand.u32 %v1198, 4294901760
    %1800 = vmatpush1.msra.mxu0 %v1799
    %1801 = vmatprep.subr.mxu0 0.0
    %v1802 = vand.u32 %v1199, 4294901760
    %1803 = vmatpush1.msra.mxu0 %v1802
    %1804 = vmatprep.subr.mxu0 0.0
    %v1805 = vand.u32 %v1200, 4294901760
    %1806 = vmatpush1.msra.mxu0 %v1805
    %1807 = vmatprep.subr.mxu0 0.0
    %1808 = vmatpush1.msra.mxu0 0.0
    %1809 = vmatprep.subr.mxu0 0.0
    %1810 = vmatpush1.msra.mxu0 0.0
    %1811 = vmatprep.subr.mxu0 0.0
    %1812 = vmatpush1.msra.mxu0 0.0
    %1813 = vmatprep.subr.mxu0 0.0
    %1814 = vmatpush1.msra.mxu0 0.0
    %1815 = vmatprep.subr.mxu0 0.0
    %1816 = vmatpush1.msra.mxu0 0.0
    %1817 = vmatprep.subr.mxu0 0.0
    %1818 = vmatpush1.msra.mxu0 0.0
    %1819 = vmatprep.subr.mxu0 0.0
    %1820 = vmatpush1.msra.mxu0 0.0
    %1821 = vmatprep.subr.mxu0 0.0
    %1822 = vmatpush1.msra.mxu0 0.0
    %1823 = vmatprep.subr.mxu0 0.0
    %1824 = vmatpush1.msra.mxu0 0.0
    %1825 = vmatprep.subr.mxu0 0.0
    %1826 = vmatpush1.msra.mxu0 0.0
    %1827 = vmatprep.subr.mxu0 0.0
    %1828 = vmatpush1.msra.mxu0 0.0
    %1829 = vmatprep.subr.mxu0 0.0
    %1830 = vmatpush1.msra.mxu0 0.0
    %1831 = vmatprep.subr.mxu0 0.0
    %1832 = vmatpush1.msra.mxu0 0.0
    %1833 = vmatprep.subr.mxu0 0.0
    %1834 = vmatpush1.msra.mxu0 0.0
    %1835 = vmatprep.subr.mxu0 0.0
    %1836 = vmatpush1.msra.mxu0 0.0
    %1837 = vmatprep.subr.mxu0 0.0
    %1838 = vmatpush1.msra.mxu0 0.0
    %1839 = vmatprep.mubr.f32.mxu0 0.0
    %v1840 = vand.u32 %v1184, 4294901760
    %1841 = vmatmul.mubr.f32.gmra.mrb[0].mxu0 %v1840
    %v1842 = vpop.f32.mrb[0].mxu0
    %v1843 = vadd.f32 %v1756, %v1842
    %v1844 = vpop.f32.mrb[0].mxu0
    %1845 = vdwg.mxu0
    %v1846 = vmax.f32 %v1843, 0.0
    %v1847 = vld [vmem:[%s4] sm:$0xff]
    %v1848 = vld [vmem:[%s4 + $0x8] sm:$0xff]
    %v1849 = vld [vmem:[%s4 + $0x10] sm:$0xff]
    %v1850 = vld [vmem:[%s4 + $0x18] sm:$0xff]
    %v1851 = vld [vmem:[%s4 + $0x20] sm:$0xff]
    %v1852 = vld [vmem:[%s4 + $0x28] sm:$0xff]
    %v1853 = vld [vmem:[%s4 + $0x30] sm:$0xff]
    %v1854 = vld [vmem:[%s4 + $0x38] sm:$0xff]
    %v1855 = vld [vmem:[%s4 + $0x40] sm:$0xff]
    %v1856 = vld [vmem:[%s4 + $0x48] sm:$0xff]
    %v1857 = vld [vmem:[%s4 + $0x50] sm:$0xff]
    %v1858 = vld [vmem:[%s4 + $0x58] sm:$0xff]
    %v1859 = vld [vmem:[%s4 + $0x60] sm:$0xff]
    %v1860 = vld [vmem:[%s4 + $0x68] sm:$0xff]
    %v1861 = vld [vmem:[%s4 + $0x70] sm:$0xff]
    %v1862 = vld [vmem:[%s4 + $0x78] sm:$0xff]
    %v1863 = vlaneseq
    %v1864 = vshrl.u32 %v1863, 7
    %v1865 = vsub.s32 0, %v1864
    %v1866 = vrot.slane %v66, %v1865
    %1867 = vmatprep.subr.mxu0 0.0
    %v1868 = vand.u32 %v1847, 4294901760
    %1869 = vmatpush1.msra.mxu0 %v1868
    %1870 = vmatprep.subr.mxu0 0.0
    %v1871 = vand.u32 %v1848, 4294901760
    %1872 = vmatpush1.msra.mxu0 %v1871
    %1873 = vmatprep.subr.mxu0 0.0
    %v1874 = vand.u32 %v1849, 4294901760
    %1875 = vmatpush1.msra.mxu0 %v1874
    %1876 = vmatprep.subr.mxu0 0.0
    %v1877 = vand.u32 %v1850, 4294901760
    %1878 = vmatpush1.msra.mxu0 %v1877
    %1879 = vmatprep.subr.mxu0 0.0
    %v1880 = vand.u32 %v1851, 4294901760
    %1881 = vmatpush1.msra.mxu0 %v1880
    %1882 = vmatprep.subr.mxu0 0.0
    %v1883 = vand.u32 %v1852, 4294901760
    %1884 = vmatpush1.msra.mxu0 %v1883
    %1885 = vmatprep.subr.mxu0 0.0
    %v1886 = vand.u32 %v1853, 4294901760
    %1887 = vmatpush1.msra.mxu0 %v1886
    %1888 = vmatprep.subr.mxu0 0.0
    %v1889 = vand.u32 %v1854, 4294901760
    %1890 = vmatpush1.msra.mxu0 %v1889
    %1891 = vmatprep.subr.mxu0 0.0
    %v1892 = vand.u32 %v1855, 4294901760
    %1893 = vmatpush1.msra.mxu0 %v1892
    %1894 = vmatprep.subr.mxu0 0.0
    %v1895 = vand.u32 %v1856, 4294901760
    %1896 = vmatpush1.msra.mxu0 %v1895
    %1897 = vmatprep.subr.mxu0 0.0
    %v1898 = vand.u32 %v1857, 4294901760
    %1899 = vmatpush1.msra.mxu0 %v1898
    %1900 = vmatprep.subr.mxu0 0.0
    %v1901 = vand.u32 %v1858, 4294901760
    %1902 = vmatpush1.msra.mxu0 %v1901
    %1903 = vmatprep.subr.mxu0 0.0
    %v1904 = vand.u32 %v1859, 4294901760
    %1905 = vmatpush1.msra.mxu0 %v1904
    %1906 = vmatprep.subr.mxu0 0.0
    %v1907 = vand.u32 %v1860, 4294901760
    %1908 = vmatpush1.msra.mxu0 %v1907
    %1909 = vmatprep.subr.mxu0 0.0
    %v1910 = vand.u32 %v1861, 4294901760
    %1911 = vmatpush1.msra.mxu0 %v1910
    %1912 = vmatprep.subr.mxu0 0.0
    %v1913 = vand.u32 %v1862, 4294901760
    %1914 = vmatpush1.msra.mxu0 %v1913
    %1915 = vmatprep.subr.mxu0 0.0
    %1916 = vmatpush1.msra.mxu0 0.0
    %1917 = vmatprep.subr.mxu0 0.0
    %1918 = vmatpush1.msra.mxu0 0.0
    %1919 = vmatprep.subr.mxu0 0.0
    %1920 = vmatpush1.msra.mxu0 0.0
    %1921 = vmatprep.subr.mxu0 0.0
    %1922 = vmatpush1.msra.mxu0 0.0
    %1923 = vmatprep.subr.mxu0 0.0
    %1924 = vmatpush1.msra.mxu0 0.0
    %1925 = vmatprep.subr.mxu0 0.0
    %1926 = vmatpush1.msra.mxu0 0.0
    %1927 = vmatprep.subr.mxu0 0.0
    %1928 = vmatpush1.msra.mxu0 0.0
    %1929 = vmatprep.subr.mxu0 0.0
    %1930 = vmatpush1.msra.mxu0 0.0
    %1931 = vmatprep.subr.mxu0 0.0
    %1932 = vmatpush1.msra.mxu0 0.0
    %1933 = vmatprep.subr.mxu0 0.0
    %1934 = vmatpush1.msra.mxu0 0.0
    %1935 = vmatprep.subr.mxu0 0.0
    %1936 = vmatpush1.msra.mxu0 0.0
    %1937 = vmatprep.subr.mxu0 0.0
    %1938 = vmatpush1.msra.mxu0 0.0
    %1939 = vmatprep.subr.mxu0 0.0
    %1940 = vmatpush1.msra.mxu0 0.0
    %1941 = vmatprep.subr.mxu0 0.0
    %1942 = vmatpush1.msra.mxu0 0.0
    %1943 = vmatprep.subr.mxu0 0.0
    %1944 = vmatpush1.msra.mxu0 0.0
    %1945 = vmatprep.subr.mxu0 0.0
    %1946 = vmatpush1.msra.mxu0 0.0
    %1947 = vmatprep.mubr.f32.mxu0 0.0
    %v1948 = vand.u32 %v1846, 4294901760
    %v1949 = vsub.f32 %v1846, %v1948
    %v1950 = vand.u32 %v1949, 4294901760
    %v1951 = vsub.f32 %v1949, %v1950
    %v1952 = vand.u32 %v1951, 4294901760
    %1953 = vmatmul.mubr.f32.gmra.mrb[0].mxu0 %v1952
    %v1954 = vpop.f32.mrb[0].mxu0
    %v1955 = vadd.f32 %v1866, %v1954
    %v1956 = vpop.f32.mrb[0].mxu0
    %1957 = vdwg.mxu0
    %1958 = vmatprep.subr.mxu0 0.0
    %v1959 = vand.u32 %v1847, 4294901760
    %v1960 = vsub.f32 %v1847, %v1959
    %v1961 = vand.u32 %v1960, 4294901760
    %v1962 = vsub.f32 %v1960, %v1961
    %v1963 = vand.u32 %v1962, 4294901760
    %1964 = vmatpush1.msra.mxu0 %v1963
    %1965 = vmatprep.subr.mxu0 0.0
    %v1966 = vand.u32 %v1848, 4294901760
    %v1967 = vsub.f32 %v1848, %v1966
    %v1968 = vand.u32 %v1967, 4294901760
    %v1969 = vsub.f32 %v1967, %v1968
    %v1970 = vand.u32 %v1969, 4294901760
    %1971 = vmatpush1.msra.mxu0 %v1970
    %1972 = vmatprep.subr.mxu0 0.0
    %v1973 = vand.u32 %v1849, 4294901760
    %v1974 = vsub.f32 %v1849, %v1973
    %v1975 = vand.u32 %v1974, 4294901760
    %v1976 = vsub.f32 %v1974, %v1975
    %v1977 = vand.u32 %v1976, 4294901760
    %1978 = vmatpush1.msra.mxu0 %v1977
    %1979 = vmatprep.subr.mxu0 0.0
    %v1980 = vand.u32 %v1850, 4294901760
    %v1981 = vsub.f32 %v1850, %v1980
    %v1982 = vand.u32 %v1981, 4294901760
    %v1983 = vsub.f32 %v1981, %v1982
    %v1984 = vand.u32 %v1983, 4294901760
    %1985 = vmatpush1.msra.mxu0 %v1984
    %1986 = vmatprep.subr.mxu0 0.0
    %v1987 = vand.u32 %v1851, 4294901760
    %v1988 = vsub.f32 %v1851, %v1987
    %v1989 = vand.u32 %v1988, 4294901760
    %v1990 = vsub.f32 %v1988, %v1989
    %v1991 = vand.u32 %v1990, 4294901760
    %1992 = vmatpush1.msra.mxu0 %v1991
    %1993 = vmatprep.subr.mxu0 0.0
    %v1994 = vand.u32 %v1852, 4294901760
    %v1995 = vsub.f32 %v1852, %v1994
    %v1996 = vand.u32 %v1995, 4294901760
    %v1997 = vsub.f32 %v1995, %v1996
    %v1998 = vand.u32 %v1997, 4294901760
    %1999 = vmatpush1.msra.mxu0 %v1998
    %2000 = vmatprep.subr.mxu0 0.0
    %v2001 = vand.u32 %v1853, 4294901760
    %v2002 = vsub.f32 %v1853, %v2001
    %v2003 = vand.u32 %v2002, 4294901760
    %v2004 = vsub.f32 %v2002, %v2003
    %v2005 = vand.u32 %v2004, 4294901760
    %2006 = vmatpush1.msra.mxu0 %v2005
    %2007 = vmatprep.subr.mxu0 0.0
    %v2008 = vand.u32 %v1854, 4294901760
    %v2009 = vsub.f32 %v1854, %v2008
    %v2010 = vand.u32 %v2009, 4294901760
    %v2011 = vsub.f32 %v2009, %v2010
    %v2012 = vand.u32 %v2011, 4294901760
    %2013 = vmatpush1.msra.mxu0 %v2012
    %2014 = vmatprep.subr.mxu0 0.0
    %v2015 = vand.u32 %v1855, 4294901760
    %v2016 = vsub.f32 %v1855, %v2015
    %v2017 = vand.u32 %v2016, 4294901760
    %v2018 = vsub.f32 %v2016, %v2017
    %v2019 = vand.u32 %v2018, 4294901760
    %2020 = vmatpush1.msra.mxu0 %v2019
    %2021 = vmatprep.subr.mxu0 0.0
    %v2022 = vand.u32 %v1856, 4294901760
    %v2023 = vsub.f32 %v1856, %v2022
    %v2024 = vand.u32 %v2023, 4294901760
    %v2025 = vsub.f32 %v2023, %v2024
    %v2026 = vand.u32 %v2025, 4294901760
    %2027 = vmatpush1.msra.mxu0 %v2026
    %2028 = vmatprep.subr.mxu0 0.0
    %v2029 = vand.u32 %v1857, 4294901760
    %v2030 = vsub.f32 %v1857, %v2029
    %v2031 = vand.u32 %v2030, 4294901760
    %v2032 = vsub.f32 %v2030, %v2031
    %v2033 = vand.u32 %v2032, 4294901760
    %2034 = vmatpush1.msra.mxu0 %v2033
    %2035 = vmatprep.subr.mxu0 0.0
    %v2036 = vand.u32 %v1858, 4294901760
    %v2037 = vsub.f32 %v1858, %v2036
    %v2038 = vand.u32 %v2037, 4294901760
    %v2039 = vsub.f32 %v2037, %v2038
    %v2040 = vand.u32 %v2039, 4294901760
    %2041 = vmatpush1.msra.mxu0 %v2040
    %2042 = vmatprep.subr.mxu0 0.0
    %v2043 = vand.u32 %v1859, 4294901760
    %v2044 = vsub.f32 %v1859, %v2043
    %v2045 = vand.u32 %v2044, 4294901760
    %v2046 = vsub.f32 %v2044, %v2045
    %v2047 = vand.u32 %v2046, 4294901760
    %2048 = vmatpush1.msra.mxu0 %v2047
    %2049 = vmatprep.subr.mxu0 0.0
    %v2050 = vand.u32 %v1860, 4294901760
    %v2051 = vsub.f32 %v1860, %v2050
    %v2052 = vand.u32 %v2051, 4294901760
    %v2053 = vsub.f32 %v2051, %v2052
    %v2054 = vand.u32 %v2053, 4294901760
    %2055 = vmatpush1.msra.mxu0 %v2054
    %2056 = vmatprep.subr.mxu0 0.0
    %v2057 = vand.u32 %v1861, 4294901760
    %v2058 = vsub.f32 %v1861, %v2057
    %v2059 = vand.u32 %v2058, 4294901760
    %v2060 = vsub.f32 %v2058, %v2059
    %v2061 = vand.u32 %v2060, 4294901760
    %2062 = vmatpush1.msra.mxu0 %v2061
    %2063 = vmatprep.subr.mxu0 0.0
    %v2064 = vand.u32 %v1862, 4294901760
    %v2065 = vsub.f32 %v1862, %v2064
    %v2066 = vand.u32 %v2065, 4294901760
    %v2067 = vsub.f32 %v2065, %v2066
    %v2068 = vand.u32 %v2067, 4294901760
    %2069 = vmatpush1.msra.mxu0 %v2068
    %2070 = vmatprep.subr.mxu0 0.0
    %2071 = vmatpush1.msra.mxu0 0.0
    %2072 = vmatprep.subr.mxu0 0.0
    %2073 = vmatpush1.msra.mxu0 0.0
    %2074 = vmatprep.subr.mxu0 0.0
    %2075 = vmatpush1.msra.mxu0 0.0
    %2076 = vmatprep.subr.mxu0 0.0
    %2077 = vmatpush1.msra.mxu0 0.0
    %2078 = vmatprep.subr.mxu0 0.0
    %2079 = vmatpush1.msra.mxu0 0.0
    %2080 = vmatprep.subr.mxu0 0.0
    %2081 = vmatpush1.msra.mxu0 0.0
    %2082 = vmatprep.subr.mxu0 0.0
    %2083 = vmatpush1.msra.mxu0 0.0
    %2084 = vmatprep.subr.mxu0 0.0
    %2085 = vmatpush1.msra.mxu0 0.0
    %2086 = vmatprep.subr.mxu0 0.0
    %2087 = vmatpush1.msra.mxu0 0.0
    %2088 = vmatprep.subr.mxu0 0.0
    %2089 = vmatpush1.msra.mxu0 0.0
    %2090 = vmatprep.subr.mxu0 0.0
    %2091 = vmatpush1.msra.mxu0 0.0
    %2092 = vmatprep.subr.mxu0 0.0
    %2093 = vmatpush1.msra.mxu0 0.0
    %2094 = vmatprep.subr.mxu0 0.0
    %2095 = vmatpush1.msra.mxu0 0.0
    %2096 = vmatprep.subr.mxu0 0.0
    %2097 = vmatpush1.msra.mxu0 0.0
    %2098 = vmatprep.subr.mxu0 0.0
    %2099 = vmatpush1.msra.mxu0 0.0
    %2100 = vmatprep.subr.mxu0 0.0
    %2101 = vmatpush1.msra.mxu0 0.0
    %2102 = vmatprep.mubr.f32.mxu0 0.0
    %v2103 = vand.u32 %v1846, 4294901760
    %2104 = vmatmul.mubr.f32.gmra.mrb[0].mxu0 %v2103
    %v2105 = vpop.f32.mrb[0].mxu0
    %v2106 = vadd.f32 %v1955, %v2105
    %v2107 = vpop.f32.mrb[0].mxu0
    %2108 = vdwg.mxu0
    %2109 = vmatprep.subr.mxu0 0.0
    %v2110 = vand.u32 %v1847, 4294901760
    %v2111 = vsub.f32 %v1847, %v2110
    %2112 = vmatpush1.msra.mxu0 %v2111
    %2113 = vmatprep.subr.mxu0 0.0
    %v2114 = vand.u32 %v1848, 4294901760
    %v2115 = vsub.f32 %v1848, %v2114
    %2116 = vmatpush1.msra.mxu0 %v2115
    %2117 = vmatprep.subr.mxu0 0.0
    %v2118 = vand.u32 %v1849, 4294901760
    %v2119 = vsub.f32 %v1849, %v2118
    %2120 = vmatpush1.msra.mxu0 %v2119
    %2121 = vmatprep.subr.mxu0 0.0
    %v2122 = vand.u32 %v1850, 4294901760
    %v2123 = vsub.f32 %v1850, %v2122
    %2124 = vmatpush1.msra.mxu0 %v2123
    %2125 = vmatprep.subr.mxu0 0.0
    %v2126 = vand.u32 %v1851, 4294901760
    %v2127 = vsub.f32 %v1851, %v2126
    %2128 = vmatpush1.msra.mxu0 %v2127
    %2129 = vmatprep.subr.mxu0 0.0
    %v2130 = vand.u32 %v1852, 4294901760
    %v2131 = vsub.f32 %v1852, %v2130
    %2132 = vmatpush1.msra.mxu0 %v2131
    %2133 = vmatprep.subr.mxu0 0.0
    %v2134 = vand.u32 %v1853, 4294901760
    %v2135 = vsub.f32 %v1853, %v2134
    %2136 = vmatpush1.msra.mxu0 %v2135
    %2137 = vmatprep.subr.mxu0 0.0
    %v2138 = vand.u32 %v1854, 4294901760
    %v2139 = vsub.f32 %v1854, %v2138
    %2140 = vmatpush1.msra.mxu0 %v2139
    %2141 = vmatprep.subr.mxu0 0.0
    %v2142 = vand.u32 %v1855, 4294901760
    %v2143 = vsub.f32 %v1855, %v2142
    %2144 = vmatpush1.msra.mxu0 %v2143
    %2145 = vmatprep.subr.mxu0 0.0
    %v2146 = vand.u32 %v1856, 4294901760
    %v2147 = vsub.f32 %v1856, %v2146
    %2148 = vmatpush1.msra.mxu0 %v2147
    %2149 = vmatprep.subr.mxu0 0.0
    %v2150 = vand.u32 %v1857, 4294901760
    %v2151 = vsub.f32 %v1857, %v2150
    %2152 = vmatpush1.msra.mxu0 %v2151
    %2153 = vmatprep.subr.mxu0 0.0
    %v2154 = vand.u32 %v1858, 4294901760
    %v2155 = vsub.f32 %v1858, %v2154
    %2156 = vmatpush1.msra.mxu0 %v2155
    %2157 = vmatprep.subr.mxu0 0.0
    %v2158 = vand.u32 %v1859, 4294901760
    %v2159 = vsub.f32 %v1859, %v2158
    %2160 = vmatpush1.msra.mxu0 %v2159
    %2161 = vmatprep.subr.mxu0 0.0
    %v2162 = vand.u32 %v1860, 4294901760
    %v2163 = vsub.f32 %v1860, %v2162
    %2164 = vmatpush1.msra.mxu0 %v2163
    %2165 = vmatprep.subr.mxu0 0.0
    %v2166 = vand.u32 %v1861, 4294901760
    %v2167 = vsub.f32 %v1861, %v2166
    %2168 = vmatpush1.msra.mxu0 %v2167
    %2169 = vmatprep.subr.mxu0 0.0
    %v2170 = vand.u32 %v1862, 4294901760
    %v2171 = vsub.f32 %v1862, %v2170
    %2172 = vmatpush1.msra.mxu0 %v2171
    %2173 = vmatprep.subr.mxu0 0.0
    %2174 = vmatpush1.msra.mxu0 0.0
    %2175 = vmatprep.subr.mxu0 0.0
    %2176 = vmatpush1.msra.mxu0 0.0
    %2177 = vmatprep.subr.mxu0 0.0
    %2178 = vmatpush1.msra.mxu0 0.0
    %2179 = vmatprep.subr.mxu0 0.0
    %2180 = vmatpush1.msra.mxu0 0.0
    %2181 = vmatprep.subr.mxu0 0.0
    %2182 = vmatpush1.msra.mxu0 0.0
    %2183 = vmatprep.subr.mxu0 0.0
    %2184 = vmatpush1.msra.mxu0 0.0
    %2185 = vmatprep.subr.mxu0 0.0
    %2186 = vmatpush1.msra.mxu0 0.0
    %2187 = vmatprep.subr.mxu0 0.0
    %2188 = vmatpush1.msra.mxu0 0.0
    %2189 = vmatprep.subr.mxu0 0.0
    %2190 = vmatpush1.msra.mxu0 0.0
    %2191 = vmatprep.subr.mxu0 0.0
    %2192 = vmatpush1.msra.mxu0 0.0
    %2193 = vmatprep.subr.mxu0 0.0
    %2194 = vmatpush1.msra.mxu0 0.0
    %2195 = vmatprep.subr.mxu0 0.0
    %2196 = vmatpush1.msra.mxu0 0.0
    %2197 = vmatprep.subr.mxu0 0.0
    %2198 = vmatpush1.msra.mxu0 0.0
    %2199 = vmatprep.subr.mxu0 0.0
    %2200 = vmatpush1.msra.mxu0 0.0
    %2201 = vmatprep.subr.mxu0 0.0
    %2202 = vmatpush1.msra.mxu0 0.0
    %2203 = vmatprep.subr.mxu0 0.0
    %2204 = vmatpush1.msra.mxu0 0.0
    %2205 = vmatprep.mubr.f32.mxu0 0.0
    %v2206 = vand.u32 %v1846, 4294901760
    %v2207 = vsub.f32 %v1846, %v2206
    %2208 = vmatmul.mubr.f32.gmra.mrb[0].mxu0 %v2207
    %v2209 = vpop.f32.mrb[0].mxu0
    %v2210 = vadd.f32 %v2106, %v2209
    %v2211 = vpop.f32.mrb[0].mxu0
    %2212 = vdwg.mxu0
    %2213 = vmatprep.subr.mxu0 0.0
    %v2214 = vand.u32 %v1847, 4294901760
    %2215 = vmatpush1.msra.mxu0 %v2214
    %2216 = vmatprep.subr.mxu0 0.0
    %v2217 = vand.u32 %v1848, 4294901760
    %2218 = vmatpush1.msra.mxu0 %v2217
    %2219 = vmatprep.subr.mxu0 0.0
    %v2220 = vand.u32 %v1849, 4294901760
    %2221 = vmatpush1.msra.mxu0 %v2220
    %2222 = vmatprep.subr.mxu0 0.0
    %v2223 = vand.u32 %v1850, 4294901760
    %2224 = vmatpush1.msra.mxu0 %v2223
    %2225 = vmatprep.subr.mxu0 0.0
    %v2226 = vand.u32 %v1851, 4294901760
    %2227 = vmatpush1.msra.mxu0 %v2226
    %2228 = vmatprep.subr.mxu0 0.0
    %v2229 = vand.u32 %v1852, 4294901760
    %2230 = vmatpush1.msra.mxu0 %v2229
    %2231 = vmatprep.subr.mxu0 0.0
    %v2232 = vand.u32 %v1853, 4294901760
    %2233 = vmatpush1.msra.mxu0 %v2232
    %2234 = vmatprep.subr.mxu0 0.0
    %v2235 = vand.u32 %v1854, 4294901760
    %2236 = vmatpush1.msra.mxu0 %v2235
    %2237 = vmatprep.subr.mxu0 0.0
    %v2238 = vand.u32 %v1855, 4294901760
    %2239 = vmatpush1.msra.mxu0 %v2238
    %2240 = vmatprep.subr.mxu0 0.0
    %v2241 = vand.u32 %v1856, 4294901760
    %2242 = vmatpush1.msra.mxu0 %v2241
    %2243 = vmatprep.subr.mxu0 0.0
    %v2244 = vand.u32 %v1857, 4294901760
    %2245 = vmatpush1.msra.mxu0 %v2244
    %2246 = vmatprep.subr.mxu0 0.0
    %v2247 = vand.u32 %v1858, 4294901760
    %2248 = vmatpush1.msra.mxu0 %v2247
    %2249 = vmatprep.subr.mxu0 0.0
    %v2250 = vand.u32 %v1859, 4294901760
    %2251 = vmatpush1.msra.mxu0 %v2250
    %2252 = vmatprep.subr.mxu0 0.0
    %v2253 = vand.u32 %v1860, 4294901760
    %2254 = vmatpush1.msra.mxu0 %v2253
    %2255 = vmatprep.subr.mxu0 0.0
    %v2256 = vand.u32 %v1861, 4294901760
    %2257 = vmatpush1.msra.mxu0 %v2256
    %2258 = vmatprep.subr.mxu0 0.0
    %v2259 = vand.u32 %v1862, 4294901760
    %2260 = vmatpush1.msra.mxu0 %v2259
    %2261 = vmatprep.subr.mxu0 0.0
    %2262 = vmatpush1.msra.mxu0 0.0
    %2263 = vmatprep.subr.mxu0 0.0
    %2264 = vmatpush1.msra.mxu0 0.0
    %2265 = vmatprep.subr.mxu0 0.0
    %2266 = vmatpush1.msra.mxu0 0.0
    %2267 = vmatprep.subr.mxu0 0.0
    %2268 = vmatpush1.msra.mxu0 0.0
    %2269 = vmatprep.subr.mxu0 0.0
    %2270 = vmatpush1.msra.mxu0 0.0
    %2271 = vmatprep.subr.mxu0 0.0
    %2272 = vmatpush1.msra.mxu0 0.0
    %2273 = vmatprep.subr.mxu0 0.0
    %2274 = vmatpush1.msra.mxu0 0.0
    %2275 = vmatprep.subr.mxu0 0.0
    %2276 = vmatpush1.msra.mxu0 0.0
    %2277 = vmatprep.subr.mxu0 0.0
    %2278 = vmatpush1.msra.mxu0 0.0
    %2279 = vmatprep.subr.mxu0 0.0
    %2280 = vmatpush1.msra.mxu0 0.0
    %2281 = vmatprep.subr.mxu0 0.0
    %2282 = vmatpush1.msra.mxu0 0.0
    %2283 = vmatprep.subr.mxu0 0.0
    %2284 = vmatpush1.msra.mxu0 0.0
    %2285 = vmatprep.subr.mxu0 0.0
    %2286 = vmatpush1.msra.mxu0 0.0
    %2287 = vmatprep.subr.mxu0 0.0
    %2288 = vmatpush1.msra.mxu0 0.0
    %2289 = vmatprep.subr.mxu0 0.0
    %2290 = vmatpush1.msra.mxu0 0.0
    %2291 = vmatprep.subr.mxu0 0.0
    %2292 = vmatpush1.msra.mxu0 0.0
    %2293 = vmatprep.mubr.f32.mxu0 0.0
    %v2294 = vand.u32 %v1846, 4294901760
    %v2295 = vsub.f32 %v1846, %v2294
    %v2296 = vand.u32 %v2295, 4294901760
    %2297 = vmatmul.mubr.f32.gmra.mrb[0].mxu0 %v2296
    %v2298 = vpop.f32.mrb[0].mxu0
    %v2299 = vadd.f32 %v2210, %v2298
    %v2300 = vpop.f32.mrb[0].mxu0
    %2301 = vdwg.mxu0
    %2302 = vmatprep.subr.mxu0 0.0
    %v2303 = vand.u32 %v1847, 4294901760
    %v2304 = vsub.f32 %v1847, %v2303
    %v2305 = vand.u32 %v2304, 4294901760
    %2306 = vmatpush1.msra.mxu0 %v2305
    %2307 = vmatprep.subr.mxu0 0.0
    %v2308 = vand.u32 %v1848, 4294901760
    %v2309 = vsub.f32 %v1848, %v2308
    %v2310 = vand.u32 %v2309, 4294901760
    %2311 = vmatpush1.msra.mxu0 %v2310
    %2312 = vmatprep.subr.mxu0 0.0
    %v2313 = vand.u32 %v1849, 4294901760
    %v2314 = vsub.f32 %v1849, %v2313
    %v2315 = vand.u32 %v2314, 4294901760
    %2316 = vmatpush1.msra.mxu0 %v2315
    %2317 = vmatprep.subr.mxu0 0.0
    %v2318 = vand.u32 %v1850, 4294901760
    %v2319 = vsub.f32 %v1850, %v2318
    %v2320 = vand.u32 %v2319, 4294901760
    %2321 = vmatpush1.msra.mxu0 %v2320
    %2322 = vmatprep.subr.mxu0 0.0
    %v2323 = vand.u32 %v1851, 4294901760
    %v2324 = vsub.f32 %v1851, %v2323
    %v2325 = vand.u32 %v2324, 4294901760
    %2326 = vmatpush1.msra.mxu0 %v2325
    %2327 = vmatprep.subr.mxu0 0.0
    %v2328 = vand.u32 %v1852, 4294901760
    %v2329 = vsub.f32 %v1852, %v2328
    %v2330 = vand.u32 %v2329, 4294901760
    %2331 = vmatpush1.msra.mxu0 %v2330
    %2332 = vmatprep.subr.mxu0 0.0
    %v2333 = vand.u32 %v1853, 4294901760
    %v2334 = vsub.f32 %v1853, %v2333
    %v2335 = vand.u32 %v2334, 4294901760
    %2336 = vmatpush1.msra.mxu0 %v2335
    %2337 = vmatprep.subr.mxu0 0.0
    %v2338 = vand.u32 %v1854, 4294901760
    %v2339 = vsub.f32 %v1854, %v2338
    %v2340 = vand.u32 %v2339, 4294901760
    %2341 = vmatpush1.msra.mxu0 %v2340
    %2342 = vmatprep.subr.mxu0 0.0
    %v2343 = vand.u32 %v1855, 4294901760
    %v2344 = vsub.f32 %v1855, %v2343
    %v2345 = vand.u32 %v2344, 4294901760
    %2346 = vmatpush1.msra.mxu0 %v2345
    %2347 = vmatprep.subr.mxu0 0.0
    %v2348 = vand.u32 %v1856, 4294901760
    %v2349 = vsub.f32 %v1856, %v2348
    %v2350 = vand.u32 %v2349, 4294901760
    %2351 = vmatpush1.msra.mxu0 %v2350
    %2352 = vmatprep.subr.mxu0 0.0
    %v2353 = vand.u32 %v1857, 4294901760
    %v2354 = vsub.f32 %v1857, %v2353
    %v2355 = vand.u32 %v2354, 4294901760
    %2356 = vmatpush1.msra.mxu0 %v2355
    %2357 = vmatprep.subr.mxu0 0.0
    %v2358 = vand.u32 %v1858, 4294901760
    %v2359 = vsub.f32 %v1858, %v2358
    %v2360 = vand.u32 %v2359, 4294901760
    %2361 = vmatpush1.msra.mxu0 %v2360
    %2362 = vmatprep.subr.mxu0 0.0
    %v2363 = vand.u32 %v1859, 4294901760
    %v2364 = vsub.f32 %v1859, %v2363
    %v2365 = vand.u32 %v2364, 4294901760
    %2366 = vmatpush1.msra.mxu0 %v2365
    %2367 = vmatprep.subr.mxu0 0.0
    %v2368 = vand.u32 %v1860, 4294901760
    %v2369 = vsub.f32 %v1860, %v2368
    %v2370 = vand.u32 %v2369, 4294901760
    %2371 = vmatpush1.msra.mxu0 %v2370
    %2372 = vmatprep.subr.mxu0 0.0
    %v2373 = vand.u32 %v1861, 4294901760
    %v2374 = vsub.f32 %v1861, %v2373
    %v2375 = vand.u32 %v2374, 4294901760
    %2376 = vmatpush1.msra.mxu0 %v2375
    %2377 = vmatprep.subr.mxu0 0.0
    %v2378 = vand.u32 %v1862, 4294901760
    %v2379 = vsub.f32 %v1862, %v2378
    %v2380 = vand.u32 %v2379, 4294901760
    %2381 = vmatpush1.msra.mxu0 %v2380
    %2382 = vmatprep.subr.mxu0 0.0
    %2383 = vmatpush1.msra.mxu0 0.0
    %2384 = vmatprep.subr.mxu0 0.0
    %2385 = vmatpush1.msra.mxu0 0.0
    %2386 = vmatprep.subr.mxu0 0.0
    %2387 = vmatpush1.msra.mxu0 0.0
    %2388 = vmatprep.subr.mxu0 0.0
    %2389 = vmatpush1.msra.mxu0 0.0
    %2390 = vmatprep.subr.mxu0 0.0
    %2391 = vmatpush1.msra.mxu0 0.0
    %2392 = vmatprep.subr.mxu0 0.0
    %2393 = vmatpush1.msra.mxu0 0.0
    %2394 = vmatprep.subr.mxu0 0.0
    %2395 = vmatpush1.msra.mxu0 0.0
    %2396 = vmatprep.subr.mxu0 0.0
    %2397 = vmatpush1.msra.mxu0 0.0
    %2398 = vmatprep.subr.mxu0 0.0
    %2399 = vmatpush1.msra.mxu0 0.0
    %2400 = vmatprep.subr.mxu0 0.0
    %2401 = vmatpush1.msra.mxu0 0.0
    %2402 = vmatprep.subr.mxu0 0.0
    %2403 = vmatpush1.msra.mxu0 0.0
    %2404 = vmatprep.subr.mxu0 0.0
    %2405 = vmatpush1.msra.mxu0 0.0
    %2406 = vmatprep.subr.mxu0 0.0
    %2407 = vmatpush1.msra.mxu0 0.0
    %2408 = vmatprep.subr.mxu0 0.0
    %2409 = vmatpush1.msra.mxu0 0.0
    %2410 = vmatprep.subr.mxu0 0.0
    %2411 = vmatpush1.msra.mxu0 0.0
    %2412 = vmatprep.subr.mxu0 0.0
    %2413 = vmatpush1.msra.mxu0 0.0
    %2414 = vmatprep.mubr.f32.mxu0 0.0
    %v2415 = vand.u32 %v1846, 4294901760
    %2416 = vmatmul.mubr.f32.gmra.mrb[0].mxu0 %v2415
    %v2417 = vpop.f32.mrb[0].mxu0
    %v2418 = vadd.f32 %v2299, %v2417
    %v2419 = vpop.f32.mrb[0].mxu0
    %2420 = vdwg.mxu0
    %2421 = vmatprep.subr.mxu0 0.0
    %v2422 = vand.u32 %v1847, 4294901760
    %2423 = vmatpush1.msra.mxu0 %v2422
    %2424 = vmatprep.subr.mxu0 0.0
    %v2425 = vand.u32 %v1848, 4294901760
    %2426 = vmatpush1.msra.mxu0 %v2425
    %2427 = vmatprep.subr.mxu0 0.0
    %v2428 = vand.u32 %v1849, 4294901760
    %2429 = vmatpush1.msra.mxu0 %v2428
    %2430 = vmatprep.subr.mxu0 0.0
    %v2431 = vand.u32 %v1850, 4294901760
    %2432 = vmatpush1.msra.mxu0 %v2431
    %2433 = vmatprep.subr.mxu0 0.0
    %v2434 = vand.u32 %v1851, 4294901760
    %2435 = vmatpush1.msra.mxu0 %v2434
    %2436 = vmatprep.subr.mxu0 0.0
    %v2437 = vand.u32 %v1852, 4294901760
    %2438 = vmatpush1.msra.mxu0 %v2437
    %2439 = vmatprep.subr.mxu0 0.0
    %v2440 = vand.u32 %v1853, 4294901760
    %2441 = vmatpush1.msra.mxu0 %v2440
    %2442 = vmatprep.subr.mxu0 0.0
    %v2443 = vand.u32 %v1854, 4294901760
    %2444 = vmatpush1.msra.mxu0 %v2443
    %2445 = vmatprep.subr.mxu0 0.0
    %v2446 = vand.u32 %v1855, 4294901760
    %2447 = vmatpush1.msra.mxu0 %v2446
    %2448 = vmatprep.subr.mxu0 0.0
    %v2449 = vand.u32 %v1856, 4294901760
    %2450 = vmatpush1.msra.mxu0 %v2449
    %2451 = vmatprep.subr.mxu0 0.0
    %v2452 = vand.u32 %v1857, 4294901760
    %2453 = vmatpush1.msra.mxu0 %v2452
    %2454 = vmatprep.subr.mxu0 0.0
    %v2455 = vand.u32 %v1858, 4294901760
    %2456 = vmatpush1.msra.mxu0 %v2455
    %2457 = vmatprep.subr.mxu0 0.0
    %v2458 = vand.u32 %v1859, 4294901760
    %2459 = vmatpush1.msra.mxu0 %v2458
    %2460 = vmatprep.subr.mxu0 0.0
    %v2461 = vand.u32 %v1860, 4294901760
    %2462 = vmatpush1.msra.mxu0 %v2461
    %2463 = vmatprep.subr.mxu0 0.0
    %v2464 = vand.u32 %v1861, 4294901760
    %2465 = vmatpush1.msra.mxu0 %v2464
    %2466 = vmatprep.subr.mxu0 0.0
    %v2467 = vand.u32 %v1862, 4294901760
    %2468 = vmatpush1.msra.mxu0 %v2467
    %2469 = vmatprep.subr.mxu0 0.0
    %2470 = vmatpush1.msra.mxu0 0.0
    %2471 = vmatprep.subr.mxu0 0.0
    %2472 = vmatpush1.msra.mxu0 0.0
    %2473 = vmatprep.subr.mxu0 0.0
    %2474 = vmatpush1.msra.mxu0 0.0
    %2475 = vmatprep.subr.mxu0 0.0
    %2476 = vmatpush1.msra.mxu0 0.0
    %2477 = vmatprep.subr.mxu0 0.0
    %2478 = vmatpush1.msra.mxu0 0.0
    %2479 = vmatprep.subr.mxu0 0.0
    %2480 = vmatpush1.msra.mxu0 0.0
    %2481 = vmatprep.subr.mxu0 0.0
    %2482 = vmatpush1.msra.mxu0 0.0
    %2483 = vmatprep.subr.mxu0 0.0
    %2484 = vmatpush1.msra.mxu0 0.0
    %2485 = vmatprep.subr.mxu0 0.0
    %2486 = vmatpush1.msra.mxu0 0.0
    %2487 = vmatprep.subr.mxu0 0.0
    %2488 = vmatpush1.msra.mxu0 0.0
    %2489 = vmatprep.subr.mxu0 0.0
    %2490 = vmatpush1.msra.mxu0 0.0
    %2491 = vmatprep.subr.mxu0 0.0
    %2492 = vmatpush1.msra.mxu0 0.0
    %2493 = vmatprep.subr.mxu0 0.0
    %2494 = vmatpush1.msra.mxu0 0.0
    %2495 = vmatprep.subr.mxu0 0.0
    %2496 = vmatpush1.msra.mxu0 0.0
    %2497 = vmatprep.subr.mxu0 0.0
    %2498 = vmatpush1.msra.mxu0 0.0
    %2499 = vmatprep.subr.mxu0 0.0
    %2500 = vmatpush1.msra.mxu0 0.0
    %2501 = vmatprep.mubr.f32.mxu0 0.0
    %v2502 = vand.u32 %v1846, 4294901760
    %2503 = vmatmul.mubr.f32.gmra.mrb[0].mxu0 %v2502
    %v2504 = vpop.f32.mrb[0].mxu0
    %v2505 = vadd.f32 %v2418, %v2504
    %v2506 = vpop.f32.mrb[0].mxu0
    %2507 = vdwg.mxu0
    %v2508 = vlaneseq
    %v2509 = vshrl.u32 %v2508, 7
    %v2510 = vsub.s32 1, %v2509
    %v2511 = vrot.slane %v66, %v2510
    %v2512 = vmul.f32 %v2511, %v2505
    %v2513 = vxor.u32 %v2512, 2147483648
    %v2514 = vmul.f32 %v2513, 1.442695
    %v2515 = vpow.pop %v2514
    %v2516 = vadd.f32 %v2515, 1.0
    %v2517 = vrcp.pop %v2516
    %v2518 = vmul.f32 1.0, %v2517
    %v2519 = vmul.f32 %v2511, %v2518
    %v2520 = vlaneseq
    %v2521 = vshrl.u32 %v2520, 7
    %v2522 = vsub.s32 2, %v2521
    %v2523 = vrot.slane %v66, %v2522
    %v2524 = vsub.f32 %v2519, %v2523
    %2525 = vst.msk [vmem:[#allocation8] sm:$0xff] %vm72, %v2524
    // Predicated region
    $region42: #{tpu_custom_call.1} parent=1 // pred_check
      _
    $region43: #{tpu_custom_call.1} parent=1 // pred_check_branch
      %2527 = sbr.rel (0) target = $region45
    $region44: #{tpu_custom_call.1} parent=1 // pred_region
      %s2529 = ssub.s32 128, 128
      %2530 = vsyncadd [#allocation4], %s2529
      %s2532 = sshll.u32 [#allocation8], 4
      %s2533 = int_to_ptr.vmem [resolvable:$true] %s2532
      %2535 = dma.vmem_to_hbm [thread:$0]  %s2533, 128, %s7, [#allocation4]
    $region45: #{tpu_custom_call.1} parent=1 // pred_fallthru
      _
    // Predicated region
    $region46: #{tpu_custom_call.1} parent=1 // pred_check
      _
    $region47: #{tpu_custom_call.1} parent=1 // pred_check_branch
      %2537 = sbr.rel (0) target = $region49
    $region48: #{tpu_custom_call.1} parent=1 // pred_region
      %2538 = dma.done [#allocation4], 128
    $region49: #{tpu_custom_call.1} parent=1 // pred_fallthru
      _
    %2539 = vsyncpa [#allocation3], 1
    %2540 = vsyncpa [#allocation6], 1
    %2541 = vsyncpa [#allocation4], 1

</llo_original>
